<compile_context>
chip_gen: v7x
topology: tpu7x:2x2x1
jax: 0.10.0
libtpu: 0.0.40
codegen_flags: <defaults>
</compile_context>

<pallas_src>
import numpy as np
import jax
import jax.numpy as jnp
from jax.experimental import pallas as pl
from jax.experimental.pallas import tpu as pltpu

# ----------------------------------------------------------------------------------
# Synthetic "globalvar" kinematics: 1 root + 5 chains of 4 joints (hand-like), 21 joints.
# ----------------------------------------------------------------------------------
STATIC_JOINT_NUM = 21
KINTREE_PARENTS = [-1,
                   0, 1, 2, 3,
                   0, 5, 6, 7,
                   0, 9, 10, 11,
                   0, 13, 14, 15,
                   0, 17, 18, 19]
JOINT_ID_BONE_DICT = {i: i for i in range(1, STATIC_JOINT_NUM)}  # joint i driven by bone i

NCOMPS_SHAPE = 35      # ncomps_shape in the module
NUM_VERTS = 256        # synthetic template vertex count (lane-dense)
NUM_JOINTS = STATIC_JOINT_NUM

# The fused kernel hard-codes the regular 1 + 5x4 topology with identity bone map;
# guard against silent topology changes (review correctness concern).
assert KINTREE_PARENTS == [-1] + [0 if (j - 1) % 4 == 0 else j - 1
                                  for j in range(1, STATIC_JOINT_NUM)]
assert all(JOINT_ID_BONE_DICT[j] == j for j in range(1, STATIC_JOINT_NUM))


# ----------------------------------------------------------------------------------
# Fused Pallas kernel
# ----------------------------------------------------------------------------------
def _bone_fused_kernel(param_ref, pose_ref, sdirs_ref, tmpl_ref, jreg_ref, w_ref,
                       verts_ref, jtr_ref):
    """Fused BoneLayer forward (single grid-free invocation).

    param  : (B, S)        shape PCA coefficients
    pose   : (45, B, 8)    rotations, index l*9 + 3r + c; level 0 = root replicated
                           over the 5 chain lanes, levels 1..4 = per-chain bone rot
    sdirs  : (S, 3V)       fused shape dirs, column c*V + v = shapedirs[v, c, s]
    tmpl   : (1, 3V)       fused template, column c*V + v = v_template[v, c]
    jreg   : (V, 40)       level-blocked joint regressor, column l*8 + ch
    w      : (40, V)       level-blocked skinning weights, row l*8 + ch
    out verts : (3B, V)    posed verts, row = r*B + b
    out jtr   : (15B, 8)   global joint positions, row = (l*3 + r)*B + b, lane = chain
    """
    B = param_ref.shape[0]
    V3 = sdirs_ref.shape[1]
    V = V3 // 3
    B3 = 3 * B

    # ---- 1. shape blend (1 MXU matmul): v_shaped as (B, 3V) = [x | y | z] lanes ----
    v = jnp.dot(param_ref[...], sdirs_ref[...],
                preferred_element_type=jnp.float32) + tmpl_ref[...]
    rx = v[:, 0:V]
    ry = v[:, V:2 * V]
    rz = v[:, 2 * V:3 * V]

    # ---- 2. joint regression (1 MXU matmul), level-blocked lanes ----
    vstack = jnp.concatenate([rx, ry, rz], axis=0)                      # (3B, V), row = c*B + b
    jall = jnp.dot(vstack, jreg_ref[...], preferred_element_type=jnp.float32)  # (3B, 40)
    # jc[l][c] : (B, 8) joint positions (coord c) of the level-l block (level 0 = root).
    jc = [[jall[c * B:(c + 1) * B, 8 * l:8 * l + 8] for c in range(3)] for l in range(5)]

    # ---- 3. kinematic chain: level 0 = root, levels 1..4 composed level-by-level ----
    def rot(l):
        # rot(l)[r][c] : (B, 8) rotation element (r, c) for the 5 chains of level l.
        return [[pose_ref[l * 9 + 3 * r + c] for c in range(3)] for r in range(3)]

    G = [rot(0)]                                    # G[l][r][c] global rotation, (B, 8)
    T = [[jc[0][c] for c in range(3)]]              # T[l][r]    global translation, (B, 8)
    for l in range(1, 5):
        R = rot(l)
        t = [jc[l][c] - jc[l - 1][c] for c in range(3)]                 # relative offsets
        Gp, Tp = G[l - 1], T[l - 1]
        G.append([[Gp[r][0] * R[0][c] + Gp[r][1] * R[1][c] + Gp[r][2] * R[2][c]
                   for c in range(3)] for r in range(3)])
        T.append([Gp[r][0] * t[0] + Gp[r][1] * t[1] + Gp[r][2] * t[2] + Tp[r]
                  for r in range(3)])

    # ---- 4. results2 + LBS skinning: per level, (12B, 8) @ (8, V) MXU matmul ----
    t_acc = None
    for l in range(5):
        # adjusted translation column: t_l - R_l @ j_l   (== th_results2[:, :, 3, :])
        a3 = [T[l][r] - (G[l][r][0] * jc[l][0] + G[l][r][1] * jc[l][1]
                         + G[l][r][2] * jc[l][2]) for r in range(3)]
        pieces = [G[l][r][c] for c in range(3) for r in range(3)] + a3  # c-major, r-minor
        a_stack = jnp.concatenate(pieces, axis=0)                       # (12B, 8)
        part = jnp.dot(a_stack, w_ref[8 * l:8 * l + 8, :],
                       preferred_element_type=jnp.float32)              # (12B, V)
        t_acc = part if t_acc is None else t_acc + part

    # ---- 5. vectorized epilogue: full-tile FMAs + single lane-dense store ----
    rest_x = jnp.concatenate([rx, rx, rx], axis=0)                      # (3B, V), row = r*B + b
    rest_y = jnp.concatenate([ry, ry, ry], axis=0)
    rest_z = jnp.concatenate([rz, rz, rz], axis=0)
    verts_ref[...] = (t_acc[0:B3] * rest_x + t_acc[B3:2 * B3] * rest_y
                      + t_acc[2 * B3:3 * B3] * rest_z + t_acc[3 * B3:4 * B3])

    # ---- 6. global joint positions ----
    jtr_ref[...] = jnp.concatenate([T[l][r] for l in range(5) for r in range(3)], axis=0)


def _fused_forward(shape_param, pose_rel, params):
    B = shape_param.shape[0]
    V = NUM_VERTS
    vmem = pltpu.MemorySpace.VMEM
    return pl.pallas_call(
        _bone_fused_kernel,
        out_shape=(jax.ShapeDtypeStruct((3 * B, V), jnp.float32),
                   jax.ShapeDtypeStruct((15 * B, 8), jnp.float32)),
        in_specs=[pl.BlockSpec(memory_space=vmem) for _ in range(6)],
        out_specs=(pl.BlockSpec(memory_space=vmem),
                   pl.BlockSpec(memory_space=vmem)),
    )(shape_param, pose_rel, params["shapedirs_f"], params["v_template_f"],
      params["jreg_lvl"], params["w_lvl"])


def bone_layer_forward(full_pose, shape_param, params):
    """BoneLayer.forward(th_full_pose (dim 4), th_shape_param) with th_offset=None,
    th_scale=None, root_position=None (the default path)."""
    # TODO(synk): optional th_offset / th_scale / root_position branches not exercised
    # (None in the canonical call); they are simple elementwise post-ops on the outputs.
    B = full_pose.shape[0]
    V = NUM_VERTS

    # ---- marshal the pose into the level-blocked (45, B, 8) layout the kernel reads ----
    root = jnp.transpose(full_pose[:, 0], (1, 2, 0))                        # (3, 3, B)
    root_blk = jnp.broadcast_to(root[:, :, :, None], (3, 3, B, 5))[None]    # (1, 3, 3, B, 5)
    fingers = jnp.transpose(full_pose[:, 1:].reshape(B, 5, 4, 3, 3),
                            (2, 3, 4, 0, 1))                                # (lvl, r, c, B, ch)
    blocks = jnp.concatenate([root_blk, fingers], axis=0)                   # (5, 3, 3, B, 5)
    pose_rel = jnp.pad(blocks, ((0, 0),) * 4 + ((0, 3),)).reshape(45, B, 8)

    verts_rows, jtr_rows = _fused_forward(shape_param, pose_rel, params)

    th_verts = jnp.transpose(verts_rows.reshape(3, B, V), (1, 2, 0))        # (B, V, 3)

    jtr = jtr_rows.reshape(5, 3, B, 8)
    root_j = jnp.transpose(jtr[0, :, :, 0], (1, 0))[:, None, :]             # (B, 1, 3)
    fing_j = jnp.transpose(jtr[1:, :, :, :5], (2, 3, 0, 1)).reshape(B, 20, 3)
    th_jtr = jnp.concatenate([root_j, fing_j], axis=1)                      # (B, 21, 3)
    return th_verts, th_jtr


# ----------------------------------------------------------------------------------
# Host-side one-time constant preparation (level-blocked layouts)
# ----------------------------------------------------------------------------------
def build_params(v_template, basis, weights_vj, J_reg):
    V = int(v_template.shape[0])
    S = int(basis.shape[0])
    basis_svc = np.asarray(basis, np.float32).reshape(S, V, 3)
    shapedirs_f = np.transpose(basis_svc, (0, 2, 1)).reshape(S, 3 * V)      # (S, 3V)
    v_template_f = np.asarray(v_template, np.float32).T.reshape(1, 3 * V)   # (1, 3V)

    Jr = np.asarray(J_reg, np.float32)                                      # (J, V)
    Wv = np.asarray(weights_vj, np.float32)                                 # (V, J)

    jreg_lvl = np.zeros((V, 40), np.float32)
    w_lvl = np.zeros((40, V), np.float32)
    # level 0 = root: regressor replicated over the 5 chain lanes (needed as the shared
    # parent position), skinning weight row only once (so the root is not counted 5x).
    jreg_lvl[:, 0:5] = Jr[0][:, None]
    w_lvl[0, :] = Wv[:, 0]
    for l in range(1, 5):
        for ch in range(5):
            j = 1 + 4 * ch + (l - 1)
            jreg_lvl[:, l * 8 + ch] = Jr[j]
            w_lvl[l * 8 + ch, :] = Wv[:, j]

    return {
        "shapedirs_f": jnp.asarray(shapedirs_f),
        "v_template_f": jnp.asarray(v_template_f),
        "jreg_lvl": jnp.asarray(jreg_lvl),
        "w_lvl": jnp.asarray(w_lvl),
    }


# ----------------------------------------------------------------------------------
# Pure-JAX reference (direct translation of the PyTorch forward, HIGHEST precision,
# original sequential per-joint kinematic chain)
# ----------------------------------------------------------------------------------
def _with_zeros(mat34):
    B = mat34.shape[0]
    bottom = jnp.broadcast_to(jnp.array([[0.0, 0.0, 0.0, 1.0]], jnp.float32), (B, 1, 4))
    return jnp.concatenate([mat34, bottom], axis=1)


def _kinematic_chain_ref(full_pose, joints):
    B = full_pose.shape[0]
    root_rot = full_pose[:, 0]
    rot_map = full_pose[:, 1:].reshape(B, -1)
    results = [None] * STATIC_JOINT_NUM
    root_j = joints[:, 0, :, None]
    results[0] = _with_zeros(jnp.concatenate([root_rot, root_j], axis=2))
    for i in range(1, STATIC_JOINT_NUM):
        bone = JOINT_ID_BONE_DICT[i]
        joint_rot = rot_map[:, (bone - 1) * 9:bone * 9].reshape(B, 3, 3)
        parent = KINTREE_PARENTS[i]
        tvec = (joints[:, i] - joints[:, parent])[:, :, None]
        rel = _with_zeros(jnp.concatenate([joint_rot, tvec], axis=2))
        results[i] = jnp.matmul(results[parent], rel)
    return jnp.stack(results, axis=1)                                       # (B, J, 4, 4)


def reference_forward(full_pose, shape_param, shapedirs_vcs, v_template_vc, J_reg, weights_vj):
    hi = jax.lax.Precision.HIGHEST
    B = full_pose.shape[0]
    V = v_template_vc.shape[0]
    J = J_reg.shape[0]
    v_shaped = jnp.einsum('vcs,bs->bvc', shapedirs_vcs, shape_param,
                          precision=hi) + v_template_vc[None]
    th_j = jnp.einsum('jv,bvc->bjc', J_reg, v_shaped, precision=hi)
    Rg = _kinematic_chain_ref(full_pose, th_j)
    j_h = jnp.concatenate([th_j, jnp.zeros((B, J, 1), jnp.float32)], axis=2)
    tmp = jnp.einsum('bjrc,bjc->bjr', Rg, j_h, precision=hi)
    pack = jnp.zeros((B, J, 4, 4), jnp.float32).at[:, :, :, 3].set(tmp)
    results2 = jnp.transpose(Rg - pack, (0, 2, 3, 1))                       # (B, 4, 4, J)
    th_T = jnp.einsum('brkj,vj->brkv', results2, weights_vj, precision=hi)
    rest_h = jnp.concatenate([jnp.transpose(v_shaped, (0, 2, 1)),
                              jnp.ones((B, 1, V), jnp.float32)], axis=1)
    verts = jnp.sum(th_T * rest_h[:, None], axis=2)                         # (B, 4, V)
    th_verts = jnp.transpose(verts, (0, 2, 1))[:, :, :3]
    th_jtr = Rg[:, :, :3, 3]
    return th_verts, th_jtr


def batch_rodrigues(aa):
    angle = jnp.linalg.norm(aa, axis=-1, keepdims=True) + 1e-8
    axis = aa / angle
    x, y, z = axis[..., 0], axis[..., 1], axis[..., 2]
    c = jnp.cos(angle)[..., 0]
    s = jnp.sin(angle)[..., 0]
    C = 1.0 - c
    R = jnp.stack([c + x * x * C, x * y * C - z * s, x * z * C + y * s,
                   y * x * C + z * s, c + y * y * C, y * z * C - x * s,
                   z * x * C - y * s, z * y * C + x * s, c + z * z * C], axis=-1)
    return R.reshape(aa.shape[:-1] + (3, 3))


# ----------------------------------------------------------------------------------
if __name__ == "__main__":
    B, V, J, S = 2, NUM_VERTS, NUM_JOINTS, NCOMPS_SHAPE
    key = jax.random.PRNGKey(0)
    k1, k2, k3, k4, k5, k6 = jax.random.split(key, 6)

    # Deterministic synthetic "template_ske" / PCA / regressor buffers (no file loads).
    v_template = jax.random.normal(k1, (V, 3), jnp.float32) * 0.1            # shape_pca mean
    basis = jax.random.normal(k2, (S, V * 3), jnp.float32) * 0.01            # shape_pca basis
    weights_vj = jax.nn.softmax(jax.random.normal(k3, (V, J), jnp.float32), axis=1)
    J_reg = jax.nn.softmax(jax.random.normal(k4, (J, V), jnp.float32), axis=1)

    params = build_params(np.asarray(v_template), np.asarray(basis),
                          np.asarray(weights_vj), np.asarray(J_reg))
    shapedirs_vcs = jnp.transpose(basis.reshape(S, V, 3), (1, 2, 0))         # torch layout (V,3,S)

    # Inputs: th_full_pose as (B, J, 3, 3) rotation matrices (dim==4 path),
    # th_shape_param as (B, 35); th_offset / th_scale / root_position = None.
    axis_angle = jax.random.normal(k5, (B, J, 3), jnp.float32) * 0.3
    full_pose = batch_rodrigues(axis_angle)                                  # (B, 21, 3, 3)
    shape_param = jax.random.normal(k6, (B, S), jnp.float32) * 0.5

    fwd = jax.jit(lambda fp, sp: bone_layer_forward(fp, sp, params))
    verts, jtr = fwd(full_pose, shape_param)
    verts, jtr = jax.block_until_ready((verts, jtr))

    ref_verts, ref_jtr = reference_forward(full_pose, shape_param,
                                           shapedirs_vcs, v_template, J_reg, weights_vj)
    np.testing.assert_allclose(np.asarray(verts), np.asarray(ref_verts), rtol=1e-3, atol=1e-3)
    np.testing.assert_allclose(np.asarray(jtr), np.asarray(ref_jtr), rtol=1e-3, atol=1e-3)
    assert verts.shape == (B, V, 3) and jtr.shape == (B, J, 3)

    print("KERNEL_OK")
</pallas_src>

<mosaic_0001>
module attributes {stable_mosaic.version = 11 : i64} {
  func.func @_bone_fused_kernel(%arg0: memref<2x35xf32, #tpu.memory_space<vmem>>, %arg1: memref<45x2x8xf32, #tpu.memory_space<vmem>>, %arg2: memref<35x768xf32, #tpu.memory_space<vmem>>, %arg3: memref<1x768xf32, #tpu.memory_space<vmem>>, %arg4: memref<256x40xf32, #tpu.memory_space<vmem>>, %arg5: memref<40x256xf32, #tpu.memory_space<vmem>>, %arg6: memref<6x256xf32, #tpu.memory_space<vmem>>, %arg7: memref<30x8xf32, #tpu.memory_space<vmem>>) attributes {dimension_semantics = [], scalar_prefetch = 0 : i64, scratch_operands = 0 : i64, tpu.core_type = #tpu.core_type<tc>} {
    %c0 = arith.constant 0 : index
    %c0_0 = arith.constant 0 : index
    %0 = vector.load %arg0[%c0, %c0_0] : memref<2x35xf32, #tpu.memory_space<vmem>>, vector<2x35xf32>
    %c0_1 = arith.constant 0 : index
    %c0_2 = arith.constant 0 : index
    %1 = vector.load %arg2[%c0_1, %c0_2] : memref<35x768xf32, #tpu.memory_space<vmem>>, vector<35x768xf32>
    %cst = arith.constant dense<0.000000e+00> : vector<2x768xf32>
    %2 = tpu.matmul %0, %1, %cst {dimension_numbers = #tpu.dot_dimension_numbers<[1], [0], [0], [1], [0, 0, 1, 1], [], []>} : vector<2x35xf32>, vector<35x768xf32>, vector<2x768xf32> -> vector<2x768xf32>
    %c0_3 = arith.constant 0 : index
    %c0_4 = arith.constant 0 : index
    %3 = vector.load %arg3[%c0_3, %c0_4] : memref<1x768xf32, #tpu.memory_space<vmem>>, vector<1x768xf32>
    %4 = vector.broadcast %3 : vector<1x768xf32> to vector<2x768xf32>
    %5 = arith.addf %2, %4 : vector<2x768xf32>
    %6 = vector.extract_strided_slice %5 {offsets = [0, 0], sizes = [2, 256], strides = [1, 1]} : vector<2x768xf32> to vector<2x256xf32>
    %7 = vector.extract_strided_slice %5 {offsets = [0, 256], sizes = [2, 256], strides = [1, 1]} : vector<2x768xf32> to vector<2x256xf32>
    %8 = vector.extract_strided_slice %5 {offsets = [0, 512], sizes = [2, 256], strides = [1, 1]} : vector<2x768xf32> to vector<2x256xf32>
    %9 = tpu.concatenate %6, %7, %8 in 0 : vector<2x256xf32>, vector<2x256xf32>, vector<2x256xf32> -> vector<6x256xf32>
    %c0_5 = arith.constant 0 : index
    %c0_6 = arith.constant 0 : index
    %10 = vector.load %arg4[%c0_5, %c0_6] : memref<256x40xf32, #tpu.memory_space<vmem>>, vector<256x40xf32>
    %cst_7 = arith.constant dense<0.000000e+00> : vector<6x40xf32>
    %11 = tpu.matmul %9, %10, %cst_7 {dimension_numbers = #tpu.dot_dimension_numbers<[1], [0], [0], [1], [0, 0, 1, 1], [], []>} : vector<6x256xf32>, vector<256x40xf32>, vector<6x40xf32> -> vector<6x40xf32>
    %12 = vector.extract_strided_slice %11 {offsets = [0, 0], sizes = [2, 8], strides = [1, 1]} : vector<6x40xf32> to vector<2x8xf32>
    %13 = vector.extract_strided_slice %11 {offsets = [2, 0], sizes = [2, 8], strides = [1, 1]} : vector<6x40xf32> to vector<2x8xf32>
    %14 = vector.extract_strided_slice %11 {offsets = [4, 0], sizes = [2, 8], strides = [1, 1]} : vector<6x40xf32> to vector<2x8xf32>
    %15 = vector.extract_strided_slice %11 {offsets = [0, 8], sizes = [2, 8], strides = [1, 1]} : vector<6x40xf32> to vector<2x8xf32>
    %16 = vector.extract_strided_slice %11 {offsets = [2, 8], sizes = [2, 8], strides = [1, 1]} : vector<6x40xf32> to vector<2x8xf32>
    %17 = vector.extract_strided_slice %11 {offsets = [4, 8], sizes = [2, 8], strides = [1, 1]} : vector<6x40xf32> to vector<2x8xf32>
    %18 = vector.extract_strided_slice %11 {offsets = [0, 16], sizes = [2, 8], strides = [1, 1]} : vector<6x40xf32> to vector<2x8xf32>
    %19 = vector.extract_strided_slice %11 {offsets = [2, 16], sizes = [2, 8], strides = [1, 1]} : vector<6x40xf32> to vector<2x8xf32>
    %20 = vector.extract_strided_slice %11 {offsets = [4, 16], sizes = [2, 8], strides = [1, 1]} : vector<6x40xf32> to vector<2x8xf32>
    %21 = vector.extract_strided_slice %11 {offsets = [0, 24], sizes = [2, 8], strides = [1, 1]} : vector<6x40xf32> to vector<2x8xf32>
    %22 = vector.extract_strided_slice %11 {offsets = [2, 24], sizes = [2, 8], strides = [1, 1]} : vector<6x40xf32> to vector<2x8xf32>
    %23 = vector.extract_strided_slice %11 {offsets = [4, 24], sizes = [2, 8], strides = [1, 1]} : vector<6x40xf32> to vector<2x8xf32>
    %24 = vector.extract_strided_slice %11 {offsets = [0, 32], sizes = [2, 8], strides = [1, 1]} : vector<6x40xf32> to vector<2x8xf32>
    %25 = vector.extract_strided_slice %11 {offsets = [2, 32], sizes = [2, 8], strides = [1, 1]} : vector<6x40xf32> to vector<2x8xf32>
    %26 = vector.extract_strided_slice %11 {offsets = [4, 32], sizes = [2, 8], strides = [1, 1]} : vector<6x40xf32> to vector<2x8xf32>
    %c0_8 = arith.constant 0 : index
    %c0_9 = arith.constant 0 : index
    %c0_10 = arith.constant 0 : index
    %27 = vector.load %arg1[%c0_8, %c0_9, %c0_10] : memref<45x2x8xf32, #tpu.memory_space<vmem>>, vector<1x2x8xf32>
    %28 = vector.shape_cast %27 : vector<1x2x8xf32> to vector<2x8xf32>
    %c1 = arith.constant 1 : index
    %c0_11 = arith.constant 0 : index
    %c0_12 = arith.constant 0 : index
    %29 = vector.load %arg1[%c1, %c0_11, %c0_12] : memref<45x2x8xf32, #tpu.memory_space<vmem>>, vector<1x2x8xf32>
    %30 = vector.shape_cast %29 : vector<1x2x8xf32> to vector<2x8xf32>
    %c2 = arith.constant 2 : index
    %c0_13 = arith.constant 0 : index
    %c0_14 = arith.constant 0 : index
    %31 = vector.load %arg1[%c2, %c0_13, %c0_14] : memref<45x2x8xf32, #tpu.memory_space<vmem>>, vector<1x2x8xf32>
    %32 = vector.shape_cast %31 : vector<1x2x8xf32> to vector<2x8xf32>
    %c3 = arith.constant 3 : index
    %c0_15 = arith.constant 0 : index
    %c0_16 = arith.constant 0 : index
    %33 = vector.load %arg1[%c3, %c0_15, %c0_16] : memref<45x2x8xf32, #tpu.memory_space<vmem>>, vector<1x2x8xf32>
    %34 = vector.shape_cast %33 : vector<1x2x8xf32> to vector<2x8xf32>
    %c4 = arith.constant 4 : index
    %c0_17 = arith.constant 0 : index
    %c0_18 = arith.constant 0 : index
    %35 = vector.load %arg1[%c4, %c0_17, %c0_18] : memref<45x2x8xf32, #tpu.memory_space<vmem>>, vector<1x2x8xf32>
    %36 = vector.shape_cast %35 : vector<1x2x8xf32> to vector<2x8xf32>
    %c5 = arith.constant 5 : index
    %c0_19 = arith.constant 0 : index
    %c0_20 = arith.constant 0 : index
    %37 = vector.load %arg1[%c5, %c0_19, %c0_20] : memref<45x2x8xf32, #tpu.memory_space<vmem>>, vector<1x2x8xf32>
    %38 = vector.shape_cast %37 : vector<1x2x8xf32> to vector<2x8xf32>
    %c6 = arith.constant 6 : index
    %c0_21 = arith.constant 0 : index
    %c0_22 = arith.constant 0 : index
    %39 = vector.load %arg1[%c6, %c0_21, %c0_22] : memref<45x2x8xf32, #tpu.memory_space<vmem>>, vector<1x2x8xf32>
    %40 = vector.shape_cast %39 : vector<1x2x8xf32> to vector<2x8xf32>
    %c7 = arith.constant 7 : index
    %c0_23 = arith.constant 0 : index
    %c0_24 = arith.constant 0 : index
    %41 = vector.load %arg1[%c7, %c0_23, %c0_24] : memref<45x2x8xf32, #tpu.memory_space<vmem>>, vector<1x2x8xf32>
    %42 = vector.shape_cast %41 : vector<1x2x8xf32> to vector<2x8xf32>
    %c8 = arith.constant 8 : index
    %c0_25 = arith.constant 0 : index
    %c0_26 = arith.constant 0 : index
    %43 = vector.load %arg1[%c8, %c0_25, %c0_26] : memref<45x2x8xf32, #tpu.memory_space<vmem>>, vector<1x2x8xf32>
    %44 = vector.shape_cast %43 : vector<1x2x8xf32> to vector<2x8xf32>
    %c9 = arith.constant 9 : index
    %c0_27 = arith.constant 0 : index
    %c0_28 = arith.constant 0 : index
    %45 = vector.load %arg1[%c9, %c0_27, %c0_28] : memref<45x2x8xf32, #tpu.memory_space<vmem>>, vector<1x2x8xf32>
    %46 = vector.shape_cast %45 : vector<1x2x8xf32> to vector<2x8xf32>
    %c10 = arith.constant 10 : index
    %c0_29 = arith.constant 0 : index
    %c0_30 = arith.constant 0 : index
    %47 = vector.load %arg1[%c10, %c0_29, %c0_30] : memref<45x2x8xf32, #tpu.memory_space<vmem>>, vector<1x2x8xf32>
    %48 = vector.shape_cast %47 : vector<1x2x8xf32> to vector<2x8xf32>
    %c11 = arith.constant 11 : index
    %c0_31 = arith.constant 0 : index
    %c0_32 = arith.constant 0 : index
    %49 = vector.load %arg1[%c11, %c0_31, %c0_32] : memref<45x2x8xf32, #tpu.memory_space<vmem>>, vector<1x2x8xf32>
    %50 = vector.shape_cast %49 : vector<1x2x8xf32> to vector<2x8xf32>
    %c12 = arith.constant 12 : index
    %c0_33 = arith.constant 0 : index
    %c0_34 = arith.constant 0 : index
    %51 = vector.load %arg1[%c12, %c0_33, %c0_34] : memref<45x2x8xf32, #tpu.memory_space<vmem>>, vector<1x2x8xf32>
    %52 = vector.shape_cast %51 : vector<1x2x8xf32> to vector<2x8xf32>
    %c13 = arith.constant 13 : index
    %c0_35 = arith.constant 0 : index
    %c0_36 = arith.constant 0 : index
    %53 = vector.load %arg1[%c13, %c0_35, %c0_36] : memref<45x2x8xf32, #tpu.memory_space<vmem>>, vector<1x2x8xf32>
    %54 = vector.shape_cast %53 : vector<1x2x8xf32> to vector<2x8xf32>
    %c14 = arith.constant 14 : index
    %c0_37 = arith.constant 0 : index
    %c0_38 = arith.constant 0 : index
    %55 = vector.load %arg1[%c14, %c0_37, %c0_38] : memref<45x2x8xf32, #tpu.memory_space<vmem>>, vector<1x2x8xf32>
    %56 = vector.shape_cast %55 : vector<1x2x8xf32> to vector<2x8xf32>
    %c15 = arith.constant 15 : index
    %c0_39 = arith.constant 0 : index
    %c0_40 = arith.constant 0 : index
    %57 = vector.load %arg1[%c15, %c0_39, %c0_40] : memref<45x2x8xf32, #tpu.memory_space<vmem>>, vector<1x2x8xf32>
    %58 = vector.shape_cast %57 : vector<1x2x8xf32> to vector<2x8xf32>
    %c16 = arith.constant 16 : index
    %c0_41 = arith.constant 0 : index
    %c0_42 = arith.constant 0 : index
    %59 = vector.load %arg1[%c16, %c0_41, %c0_42] : memref<45x2x8xf32, #tpu.memory_space<vmem>>, vector<1x2x8xf32>
    %60 = vector.shape_cast %59 : vector<1x2x8xf32> to vector<2x8xf32>
    %c17 = arith.constant 17 : index
    %c0_43 = arith.constant 0 : index
    %c0_44 = arith.constant 0 : index
    %61 = vector.load %arg1[%c17, %c0_43, %c0_44] : memref<45x2x8xf32, #tpu.memory_space<vmem>>, vector<1x2x8xf32>
    %62 = vector.shape_cast %61 : vector<1x2x8xf32> to vector<2x8xf32>
    %63 = arith.subf %15, %12 : vector<2x8xf32>
    %64 = arith.subf %16, %13 : vector<2x8xf32>
    %65 = arith.subf %17, %14 : vector<2x8xf32>
    %66 = arith.mulf %28, %46 : vector<2x8xf32>
    %67 = arith.mulf %30, %52 : vector<2x8xf32>
    %68 = arith.addf %66, %67 : vector<2x8xf32>
    %69 = arith.mulf %32, %58 : vector<2x8xf32>
    %70 = arith.addf %68, %69 : vector<2x8xf32>
    %71 = arith.mulf %28, %48 : vector<2x8xf32>
    %72 = arith.mulf %30, %54 : vector<2x8xf32>
    %73 = arith.addf %71, %72 : vector<2x8xf32>
    %74 = arith.mulf %32, %60 : vector<2x8xf32>
    %75 = arith.addf %73, %74 : vector<2x8xf32>
    %76 = arith.mulf %28, %50 : vector<2x8xf32>
    %77 = arith.mulf %30, %56 : vector<2x8xf32>
    %78 = arith.addf %76, %77 : vector<2x8xf32>
    %79 = arith.mulf %32, %62 : vector<2x8xf32>
    %80 = arith.addf %78, %79 : vector<2x8xf32>
    %81 = arith.mulf %34, %46 : vector<2x8xf32>
    %82 = arith.mulf %36, %52 : vector<2x8xf32>
    %83 = arith.addf %81, %82 : vector<2x8xf32>
    %84 = arith.mulf %38, %58 : vector<2x8xf32>
    %85 = arith.addf %83, %84 : vector<2x8xf32>
    %86 = arith.mulf %34, %48 : vector<2x8xf32>
    %87 = arith.mulf %36, %54 : vector<2x8xf32>
    %88 = arith.addf %86, %87 : vector<2x8xf32>
    %89 = arith.mulf %38, %60 : vector<2x8xf32>
    %90 = arith.addf %88, %89 : vector<2x8xf32>
    %91 = arith.mulf %34, %50 : vector<2x8xf32>
    %92 = arith.mulf %36, %56 : vector<2x8xf32>
    %93 = arith.addf %91, %92 : vector<2x8xf32>
    %94 = arith.mulf %38, %62 : vector<2x8xf32>
    %95 = arith.addf %93, %94 : vector<2x8xf32>
    %96 = arith.mulf %40, %46 : vector<2x8xf32>
    %97 = arith.mulf %42, %52 : vector<2x8xf32>
    %98 = arith.addf %96, %97 : vector<2x8xf32>
    %99 = arith.mulf %44, %58 : vector<2x8xf32>
    %100 = arith.addf %98, %99 : vector<2x8xf32>
    %101 = arith.mulf %40, %48 : vector<2x8xf32>
    %102 = arith.mulf %42, %54 : vector<2x8xf32>
    %103 = arith.addf %101, %102 : vector<2x8xf32>
    %104 = arith.mulf %44, %60 : vector<2x8xf32>
    %105 = arith.addf %103, %104 : vector<2x8xf32>
    %106 = arith.mulf %40, %50 : vector<2x8xf32>
    %107 = arith.mulf %42, %56 : vector<2x8xf32>
    %108 = arith.addf %106, %107 : vector<2x8xf32>
    %109 = arith.mulf %44, %62 : vector<2x8xf32>
    %110 = arith.addf %108, %109 : vector<2x8xf32>
    %111 = arith.mulf %28, %63 : vector<2x8xf32>
    %112 = arith.mulf %30, %64 : vector<2x8xf32>
    %113 = arith.addf %111, %112 : vector<2x8xf32>
    %114 = arith.mulf %32, %65 : vector<2x8xf32>
    %115 = arith.addf %113, %114 : vector<2x8xf32>
    %116 = arith.addf %115, %12 : vector<2x8xf32>
    %117 = arith.mulf %34, %63 : vector<2x8xf32>
    %118 = arith.mulf %36, %64 : vector<2x8xf32>
    %119 = arith.addf %117, %118 : vector<2x8xf32>
    %120 = arith.mulf %38, %65 : vector<2x8xf32>
    %121 = arith.addf %119, %120 : vector<2x8xf32>
    %122 = arith.addf %121, %13 : vector<2x8xf32>
    %123 = arith.mulf %40, %63 : vector<2x8xf32>
    %124 = arith.mulf %42, %64 : vector<2x8xf32>
    %125 = arith.addf %123, %124 : vector<2x8xf32>
    %126 = arith.mulf %44, %65 : vector<2x8xf32>
    %127 = arith.addf %125, %126 : vector<2x8xf32>
    %128 = arith.addf %127, %14 : vector<2x8xf32>
    %c18 = arith.constant 18 : index
    %c0_45 = arith.constant 0 : index
    %c0_46 = arith.constant 0 : index
    %129 = vector.load %arg1[%c18, %c0_45, %c0_46] : memref<45x2x8xf32, #tpu.memory_space<vmem>>, vector<1x2x8xf32>
    %130 = vector.shape_cast %129 : vector<1x2x8xf32> to vector<2x8xf32>
    %c19 = arith.constant 19 : index
    %c0_47 = arith.constant 0 : index
    %c0_48 = arith.constant 0 : index
    %131 = vector.load %arg1[%c19, %c0_47, %c0_48] : memref<45x2x8xf32, #tpu.memory_space<vmem>>, vector<1x2x8xf32>
    %132 = vector.shape_cast %131 : vector<1x2x8xf32> to vector<2x8xf32>
    %c20 = arith.constant 20 : index
    %c0_49 = arith.constant 0 : index
    %c0_50 = arith.constant 0 : index
    %133 = vector.load %arg1[%c20, %c0_49, %c0_50] : memref<45x2x8xf32, #tpu.memory_space<vmem>>, vector<1x2x8xf32>
    %134 = vector.shape_cast %133 : vector<1x2x8xf32> to vector<2x8xf32>
    %c21 = arith.constant 21 : index
    %c0_51 = arith.constant 0 : index
    %c0_52 = arith.constant 0 : index
    %135 = vector.load %arg1[%c21, %c0_51, %c0_52] : memref<45x2x8xf32, #tpu.memory_space<vmem>>, vector<1x2x8xf32>
    %136 = vector.shape_cast %135 : vector<1x2x8xf32> to vector<2x8xf32>
    %c22 = arith.constant 22 : index
    %c0_53 = arith.constant 0 : index
    %c0_54 = arith.constant 0 : index
    %137 = vector.load %arg1[%c22, %c0_53, %c0_54] : memref<45x2x8xf32, #tpu.memory_space<vmem>>, vector<1x2x8xf32>
    %138 = vector.shape_cast %137 : vector<1x2x8xf32> to vector<2x8xf32>
    %c23 = arith.constant 23 : index
    %c0_55 = arith.constant 0 : index
    %c0_56 = arith.constant 0 : index
    %139 = vector.load %arg1[%c23, %c0_55, %c0_56] : memref<45x2x8xf32, #tpu.memory_space<vmem>>, vector<1x2x8xf32>
    %140 = vector.shape_cast %139 : vector<1x2x8xf32> to vector<2x8xf32>
    %c24 = arith.constant 24 : index
    %c0_57 = arith.constant 0 : index
    %c0_58 = arith.constant 0 : index
    %141 = vector.load %arg1[%c24, %c0_57, %c0_58] : memref<45x2x8xf32, #tpu.memory_space<vmem>>, vector<1x2x8xf32>
    %142 = vector.shape_cast %141 : vector<1x2x8xf32> to vector<2x8xf32>
    %c25 = arith.constant 25 : index
    %c0_59 = arith.constant 0 : index
    %c0_60 = arith.constant 0 : index
    %143 = vector.load %arg1[%c25, %c0_59, %c0_60] : memref<45x2x8xf32, #tpu.memory_space<vmem>>, vector<1x2x8xf32>
    %144 = vector.shape_cast %143 : vector<1x2x8xf32> to vector<2x8xf32>
    %c26 = arith.constant 26 : index
    %c0_61 = arith.constant 0 : index
    %c0_62 = arith.constant 0 : index
    %145 = vector.load %arg1[%c26, %c0_61, %c0_62] : memref<45x2x8xf32, #tpu.memory_space<vmem>>, vector<1x2x8xf32>
    %146 = vector.shape_cast %145 : vector<1x2x8xf32> to vector<2x8xf32>
    %147 = arith.subf %18, %15 : vector<2x8xf32>
    %148 = arith.subf %19, %16 : vector<2x8xf32>
    %149 = arith.subf %20, %17 : vector<2x8xf32>
    %150 = arith.mulf %70, %130 : vector<2x8xf32>
    %151 = arith.mulf %75, %136 : vector<2x8xf32>
    %152 = arith.addf %150, %151 : vector<2x8xf32>
    %153 = arith.mulf %80, %142 : vector<2x8xf32>
    %154 = arith.addf %152, %153 : vector<2x8xf32>
    %155 = arith.mulf %70, %132 : vector<2x8xf32>
    %156 = arith.mulf %75, %138 : vector<2x8xf32>
    %157 = arith.addf %155, %156 : vector<2x8xf32>
    %158 = arith.mulf %80, %144 : vector<2x8xf32>
    %159 = arith.addf %157, %158 : vector<2x8xf32>
    %160 = arith.mulf %70, %134 : vector<2x8xf32>
    %161 = arith.mulf %75, %140 : vector<2x8xf32>
    %162 = arith.addf %160, %161 : vector<2x8xf32>
    %163 = arith.mulf %80, %146 : vector<2x8xf32>
    %164 = arith.addf %162, %163 : vector<2x8xf32>
    %165 = arith.mulf %85, %130 : vector<2x8xf32>
    %166 = arith.mulf %90, %136 : vector<2x8xf32>
    %167 = arith.addf %165, %166 : vector<2x8xf32>
    %168 = arith.mulf %95, %142 : vector<2x8xf32>
    %169 = arith.addf %167, %168 : vector<2x8xf32>
    %170 = arith.mulf %85, %132 : vector<2x8xf32>
    %171 = arith.mulf %90, %138 : vector<2x8xf32>
    %172 = arith.addf %170, %171 : vector<2x8xf32>
    %173 = arith.mulf %95, %144 : vector<2x8xf32>
    %174 = arith.addf %172, %173 : vector<2x8xf32>
    %175 = arith.mulf %85, %134 : vector<2x8xf32>
    %176 = arith.mulf %90, %140 : vector<2x8xf32>
    %177 = arith.addf %175, %176 : vector<2x8xf32>
    %178 = arith.mulf %95, %146 : vector<2x8xf32>
    %179 = arith.addf %177, %178 : vector<2x8xf32>
    %180 = arith.mulf %100, %130 : vector<2x8xf32>
    %181 = arith.mulf %105, %136 : vector<2x8xf32>
    %182 = arith.addf %180, %181 : vector<2x8xf32>
    %183 = arith.mulf %110, %142 : vector<2x8xf32>
    %184 = arith.addf %182, %183 : vector<2x8xf32>
    %185 = arith.mulf %100, %132 : vector<2x8xf32>
    %186 = arith.mulf %105, %138 : vector<2x8xf32>
    %187 = arith.addf %185, %186 : vector<2x8xf32>
    %188 = arith.mulf %110, %144 : vector<2x8xf32>
    %189 = arith.addf %187, %188 : vector<2x8xf32>
    %190 = arith.mulf %100, %134 : vector<2x8xf32>
    %191 = arith.mulf %105, %140 : vector<2x8xf32>
    %192 = arith.addf %190, %191 : vector<2x8xf32>
    %193 = arith.mulf %110, %146 : vector<2x8xf32>
    %194 = arith.addf %192, %193 : vector<2x8xf32>
    %195 = arith.mulf %70, %147 : vector<2x8xf32>
    %196 = arith.mulf %75, %148 : vector<2x8xf32>
    %197 = arith.addf %195, %196 : vector<2x8xf32>
    %198 = arith.mulf %80, %149 : vector<2x8xf32>
    %199 = arith.addf %197, %198 : vector<2x8xf32>
    %200 = arith.addf %199, %116 : vector<2x8xf32>
    %201 = arith.mulf %85, %147 : vector<2x8xf32>
    %202 = arith.mulf %90, %148 : vector<2x8xf32>
    %203 = arith.addf %201, %202 : vector<2x8xf32>
    %204 = arith.mulf %95, %149 : vector<2x8xf32>
    %205 = arith.addf %203, %204 : vector<2x8xf32>
    %206 = arith.addf %205, %122 : vector<2x8xf32>
    %207 = arith.mulf %100, %147 : vector<2x8xf32>
    %208 = arith.mulf %105, %148 : vector<2x8xf32>
    %209 = arith.addf %207, %208 : vector<2x8xf32>
    %210 = arith.mulf %110, %149 : vector<2x8xf32>
    %211 = arith.addf %209, %210 : vector<2x8xf32>
    %212 = arith.addf %211, %128 : vector<2x8xf32>
    %c27 = arith.constant 27 : index
    %c0_63 = arith.constant 0 : index
    %c0_64 = arith.constant 0 : index
    %213 = vector.load %arg1[%c27, %c0_63, %c0_64] : memref<45x2x8xf32, #tpu.memory_space<vmem>>, vector<1x2x8xf32>
    %214 = vector.shape_cast %213 : vector<1x2x8xf32> to vector<2x8xf32>
    %c28 = arith.constant 28 : index
    %c0_65 = arith.constant 0 : index
    %c0_66 = arith.constant 0 : index
    %215 = vector.load %arg1[%c28, %c0_65, %c0_66] : memref<45x2x8xf32, #tpu.memory_space<vmem>>, vector<1x2x8xf32>
    %216 = vector.shape_cast %215 : vector<1x2x8xf32> to vector<2x8xf32>
    %c29 = arith.constant 29 : index
    %c0_67 = arith.constant 0 : index
    %c0_68 = arith.constant 0 : index
    %217 = vector.load %arg1[%c29, %c0_67, %c0_68] : memref<45x2x8xf32, #tpu.memory_space<vmem>>, vector<1x2x8xf32>
    %218 = vector.shape_cast %217 : vector<1x2x8xf32> to vector<2x8xf32>
    %c30 = arith.constant 30 : index
    %c0_69 = arith.constant 0 : index
    %c0_70 = arith.constant 0 : index
    %219 = vector.load %arg1[%c30, %c0_69, %c0_70] : memref<45x2x8xf32, #tpu.memory_space<vmem>>, vector<1x2x8xf32>
    %220 = vector.shape_cast %219 : vector<1x2x8xf32> to vector<2x8xf32>
    %c31 = arith.constant 31 : index
    %c0_71 = arith.constant 0 : index
    %c0_72 = arith.constant 0 : index
    %221 = vector.load %arg1[%c31, %c0_71, %c0_72] : memref<45x2x8xf32, #tpu.memory_space<vmem>>, vector<1x2x8xf32>
    %222 = vector.shape_cast %221 : vector<1x2x8xf32> to vector<2x8xf32>
    %c32 = arith.constant 32 : index
    %c0_73 = arith.constant 0 : index
    %c0_74 = arith.constant 0 : index
    %223 = vector.load %arg1[%c32, %c0_73, %c0_74] : memref<45x2x8xf32, #tpu.memory_space<vmem>>, vector<1x2x8xf32>
    %224 = vector.shape_cast %223 : vector<1x2x8xf32> to vector<2x8xf32>
    %c33 = arith.constant 33 : index
    %c0_75 = arith.constant 0 : index
    %c0_76 = arith.constant 0 : index
    %225 = vector.load %arg1[%c33, %c0_75, %c0_76] : memref<45x2x8xf32, #tpu.memory_space<vmem>>, vector<1x2x8xf32>
    %226 = vector.shape_cast %225 : vector<1x2x8xf32> to vector<2x8xf32>
    %c34 = arith.constant 34 : index
    %c0_77 = arith.constant 0 : index
    %c0_78 = arith.constant 0 : index
    %227 = vector.load %arg1[%c34, %c0_77, %c0_78] : memref<45x2x8xf32, #tpu.memory_space<vmem>>, vector<1x2x8xf32>
    %228 = vector.shape_cast %227 : vector<1x2x8xf32> to vector<2x8xf32>
    %c35 = arith.constant 35 : index
    %c0_79 = arith.constant 0 : index
    %c0_80 = arith.constant 0 : index
    %229 = vector.load %arg1[%c35, %c0_79, %c0_80] : memref<45x2x8xf32, #tpu.memory_space<vmem>>, vector<1x2x8xf32>
    %230 = vector.shape_cast %229 : vector<1x2x8xf32> to vector<2x8xf32>
    %231 = arith.subf %21, %18 : vector<2x8xf32>
    %232 = arith.subf %22, %19 : vector<2x8xf32>
    %233 = arith.subf %23, %20 : vector<2x8xf32>
    %234 = arith.mulf %154, %214 : vector<2x8xf32>
    %235 = arith.mulf %159, %220 : vector<2x8xf32>
    %236 = arith.addf %234, %235 : vector<2x8xf32>
    %237 = arith.mulf %164, %226 : vector<2x8xf32>
    %238 = arith.addf %236, %237 : vector<2x8xf32>
    %239 = arith.mulf %154, %216 : vector<2x8xf32>
    %240 = arith.mulf %159, %222 : vector<2x8xf32>
    %241 = arith.addf %239, %240 : vector<2x8xf32>
    %242 = arith.mulf %164, %228 : vector<2x8xf32>
    %243 = arith.addf %241, %242 : vector<2x8xf32>
    %244 = arith.mulf %154, %218 : vector<2x8xf32>
    %245 = arith.mulf %159, %224 : vector<2x8xf32>
    %246 = arith.addf %244, %245 : vector<2x8xf32>
    %247 = arith.mulf %164, %230 : vector<2x8xf32>
    %248 = arith.addf %246, %247 : vector<2x8xf32>
    %249 = arith.mulf %169, %214 : vector<2x8xf32>
    %250 = arith.mulf %174, %220 : vector<2x8xf32>
    %251 = arith.addf %249, %250 : vector<2x8xf32>
    %252 = arith.mulf %179, %226 : vector<2x8xf32>
    %253 = arith.addf %251, %252 : vector<2x8xf32>
    %254 = arith.mulf %169, %216 : vector<2x8xf32>
    %255 = arith.mulf %174, %222 : vector<2x8xf32>
    %256 = arith.addf %254, %255 : vector<2x8xf32>
    %257 = arith.mulf %179, %228 : vector<2x8xf32>
    %258 = arith.addf %256, %257 : vector<2x8xf32>
    %259 = arith.mulf %169, %218 : vector<2x8xf32>
    %260 = arith.mulf %174, %224 : vector<2x8xf32>
    %261 = arith.addf %259, %260 : vector<2x8xf32>
    %262 = arith.mulf %179, %230 : vector<2x8xf32>
    %263 = arith.addf %261, %262 : vector<2x8xf32>
    %264 = arith.mulf %184, %214 : vector<2x8xf32>
    %265 = arith.mulf %189, %220 : vector<2x8xf32>
    %266 = arith.addf %264, %265 : vector<2x8xf32>
    %267 = arith.mulf %194, %226 : vector<2x8xf32>
    %268 = arith.addf %266, %267 : vector<2x8xf32>
    %269 = arith.mulf %184, %216 : vector<2x8xf32>
    %270 = arith.mulf %189, %222 : vector<2x8xf32>
    %271 = arith.addf %269, %270 : vector<2x8xf32>
    %272 = arith.mulf %194, %228 : vector<2x8xf32>
    %273 = arith.addf %271, %272 : vector<2x8xf32>
    %274 = arith.mulf %184, %218 : vector<2x8xf32>
    %275 = arith.mulf %189, %224 : vector<2x8xf32>
    %276 = arith.addf %274, %275 : vector<2x8xf32>
    %277 = arith.mulf %194, %230 : vector<2x8xf32>
    %278 = arith.addf %276, %277 : vector<2x8xf32>
    %279 = arith.mulf %154, %231 : vector<2x8xf32>
    %280 = arith.mulf %159, %232 : vector<2x8xf32>
    %281 = arith.addf %279, %280 : vector<2x8xf32>
    %282 = arith.mulf %164, %233 : vector<2x8xf32>
    %283 = arith.addf %281, %282 : vector<2x8xf32>
    %284 = arith.addf %283, %200 : vector<2x8xf32>
    %285 = arith.mulf %169, %231 : vector<2x8xf32>
    %286 = arith.mulf %174, %232 : vector<2x8xf32>
    %287 = arith.addf %285, %286 : vector<2x8xf32>
    %288 = arith.mulf %179, %233 : vector<2x8xf32>
    %289 = arith.addf %287, %288 : vector<2x8xf32>
    %290 = arith.addf %289, %206 : vector<2x8xf32>
    %291 = arith.mulf %184, %231 : vector<2x8xf32>
    %292 = arith.mulf %189, %232 : vector<2x8xf32>
    %293 = arith.addf %291, %292 : vector<2x8xf32>
    %294 = arith.mulf %194, %233 : vector<2x8xf32>
    %295 = arith.addf %293, %294 : vector<2x8xf32>
    %296 = arith.addf %295, %212 : vector<2x8xf32>
    %c36 = arith.constant 36 : index
    %c0_81 = arith.constant 0 : index
    %c0_82 = arith.constant 0 : index
    %297 = vector.load %arg1[%c36, %c0_81, %c0_82] : memref<45x2x8xf32, #tpu.memory_space<vmem>>, vector<1x2x8xf32>
    %298 = vector.shape_cast %297 : vector<1x2x8xf32> to vector<2x8xf32>
    %c37 = arith.constant 37 : index
    %c0_83 = arith.constant 0 : index
    %c0_84 = arith.constant 0 : index
    %299 = vector.load %arg1[%c37, %c0_83, %c0_84] : memref<45x2x8xf32, #tpu.memory_space<vmem>>, vector<1x2x8xf32>
    %300 = vector.shape_cast %299 : vector<1x2x8xf32> to vector<2x8xf32>
    %c38 = arith.constant 38 : index
    %c0_85 = arith.constant 0 : index
    %c0_86 = arith.constant 0 : index
    %301 = vector.load %arg1[%c38, %c0_85, %c0_86] : memref<45x2x8xf32, #tpu.memory_space<vmem>>, vector<1x2x8xf32>
    %302 = vector.shape_cast %301 : vector<1x2x8xf32> to vector<2x8xf32>
    %c39 = arith.constant 39 : index
    %c0_87 = arith.constant 0 : index
    %c0_88 = arith.constant 0 : index
    %303 = vector.load %arg1[%c39, %c0_87, %c0_88] : memref<45x2x8xf32, #tpu.memory_space<vmem>>, vector<1x2x8xf32>
    %304 = vector.shape_cast %303 : vector<1x2x8xf32> to vector<2x8xf32>
    %c40 = arith.constant 40 : index
    %c0_89 = arith.constant 0 : index
    %c0_90 = arith.constant 0 : index
    %305 = vector.load %arg1[%c40, %c0_89, %c0_90] : memref<45x2x8xf32, #tpu.memory_space<vmem>>, vector<1x2x8xf32>
    %306 = vector.shape_cast %305 : vector<1x2x8xf32> to vector<2x8xf32>
    %c41 = arith.constant 41 : index
    %c0_91 = arith.constant 0 : index
    %c0_92 = arith.constant 0 : index
    %307 = vector.load %arg1[%c41, %c0_91, %c0_92] : memref<45x2x8xf32, #tpu.memory_space<vmem>>, vector<1x2x8xf32>
    %308 = vector.shape_cast %307 : vector<1x2x8xf32> to vector<2x8xf32>
    %c42 = arith.constant 42 : index
    %c0_93 = arith.constant 0 : index
    %c0_94 = arith.constant 0 : index
    %309 = vector.load %arg1[%c42, %c0_93, %c0_94] : memref<45x2x8xf32, #tpu.memory_space<vmem>>, vector<1x2x8xf32>
    %310 = vector.shape_cast %309 : vector<1x2x8xf32> to vector<2x8xf32>
    %c43 = arith.constant 43 : index
    %c0_95 = arith.constant 0 : index
    %c0_96 = arith.constant 0 : index
    %311 = vector.load %arg1[%c43, %c0_95, %c0_96] : memref<45x2x8xf32, #tpu.memory_space<vmem>>, vector<1x2x8xf32>
    %312 = vector.shape_cast %311 : vector<1x2x8xf32> to vector<2x8xf32>
    %c44 = arith.constant 44 : index
    %c0_97 = arith.constant 0 : index
    %c0_98 = arith.constant 0 : index
    %313 = vector.load %arg1[%c44, %c0_97, %c0_98] : memref<45x2x8xf32, #tpu.memory_space<vmem>>, vector<1x2x8xf32>
    %314 = vector.shape_cast %313 : vector<1x2x8xf32> to vector<2x8xf32>
    %315 = arith.subf %24, %21 : vector<2x8xf32>
    %316 = arith.subf %25, %22 : vector<2x8xf32>
    %317 = arith.subf %26, %23 : vector<2x8xf32>
    %318 = arith.mulf %238, %298 : vector<2x8xf32>
    %319 = arith.mulf %243, %304 : vector<2x8xf32>
    %320 = arith.addf %318, %319 : vector<2x8xf32>
    %321 = arith.mulf %248, %310 : vector<2x8xf32>
    %322 = arith.addf %320, %321 : vector<2x8xf32>
    %323 = arith.mulf %238, %300 : vector<2x8xf32>
    %324 = arith.mulf %243, %306 : vector<2x8xf32>
    %325 = arith.addf %323, %324 : vector<2x8xf32>
    %326 = arith.mulf %248, %312 : vector<2x8xf32>
    %327 = arith.addf %325, %326 : vector<2x8xf32>
    %328 = arith.mulf %238, %302 : vector<2x8xf32>
    %329 = arith.mulf %243, %308 : vector<2x8xf32>
    %330 = arith.addf %328, %329 : vector<2x8xf32>
    %331 = arith.mulf %248, %314 : vector<2x8xf32>
    %332 = arith.addf %330, %331 : vector<2x8xf32>
    %333 = arith.mulf %253, %298 : vector<2x8xf32>
    %334 = arith.mulf %258, %304 : vector<2x8xf32>
    %335 = arith.addf %333, %334 : vector<2x8xf32>
    %336 = arith.mulf %263, %310 : vector<2x8xf32>
    %337 = arith.addf %335, %336 : vector<2x8xf32>
    %338 = arith.mulf %253, %300 : vector<2x8xf32>
    %339 = arith.mulf %258, %306 : vector<2x8xf32>
    %340 = arith.addf %338, %339 : vector<2x8xf32>
    %341 = arith.mulf %263, %312 : vector<2x8xf32>
    %342 = arith.addf %340, %341 : vector<2x8xf32>
    %343 = arith.mulf %253, %302 : vector<2x8xf32>
    %344 = arith.mulf %258, %308 : vector<2x8xf32>
    %345 = arith.addf %343, %344 : vector<2x8xf32>
    %346 = arith.mulf %263, %314 : vector<2x8xf32>
    %347 = arith.addf %345, %346 : vector<2x8xf32>
    %348 = arith.mulf %268, %298 : vector<2x8xf32>
    %349 = arith.mulf %273, %304 : vector<2x8xf32>
    %350 = arith.addf %348, %349 : vector<2x8xf32>
    %351 = arith.mulf %278, %310 : vector<2x8xf32>
    %352 = arith.addf %350, %351 : vector<2x8xf32>
    %353 = arith.mulf %268, %300 : vector<2x8xf32>
    %354 = arith.mulf %273, %306 : vector<2x8xf32>
    %355 = arith.addf %353, %354 : vector<2x8xf32>
    %356 = arith.mulf %278, %312 : vector<2x8xf32>
    %357 = arith.addf %355, %356 : vector<2x8xf32>
    %358 = arith.mulf %268, %302 : vector<2x8xf32>
    %359 = arith.mulf %273, %308 : vector<2x8xf32>
    %360 = arith.addf %358, %359 : vector<2x8xf32>
    %361 = arith.mulf %278, %314 : vector<2x8xf32>
    %362 = arith.addf %360, %361 : vector<2x8xf32>
    %363 = arith.mulf %238, %315 : vector<2x8xf32>
    %364 = arith.mulf %243, %316 : vector<2x8xf32>
    %365 = arith.addf %363, %364 : vector<2x8xf32>
    %366 = arith.mulf %248, %317 : vector<2x8xf32>
    %367 = arith.addf %365, %366 : vector<2x8xf32>
    %368 = arith.addf %367, %284 : vector<2x8xf32>
    %369 = arith.mulf %253, %315 : vector<2x8xf32>
    %370 = arith.mulf %258, %316 : vector<2x8xf32>
    %371 = arith.addf %369, %370 : vector<2x8xf32>
    %372 = arith.mulf %263, %317 : vector<2x8xf32>
    %373 = arith.addf %371, %372 : vector<2x8xf32>
    %374 = arith.addf %373, %290 : vector<2x8xf32>
    %375 = arith.mulf %268, %315 : vector<2x8xf32>
    %376 = arith.mulf %273, %316 : vector<2x8xf32>
    %377 = arith.addf %375, %376 : vector<2x8xf32>
    %378 = arith.mulf %278, %317 : vector<2x8xf32>
    %379 = arith.addf %377, %378 : vector<2x8xf32>
    %380 = arith.addf %379, %296 : vector<2x8xf32>
    %381 = arith.mulf %28, %12 : vector<2x8xf32>
    %382 = arith.mulf %30, %13 : vector<2x8xf32>
    %383 = arith.addf %381, %382 : vector<2x8xf32>
    %384 = arith.mulf %32, %14 : vector<2x8xf32>
    %385 = arith.addf %383, %384 : vector<2x8xf32>
    %386 = arith.subf %12, %385 : vector<2x8xf32>
    %387 = arith.mulf %34, %12 : vector<2x8xf32>
    %388 = arith.mulf %36, %13 : vector<2x8xf32>
    %389 = arith.addf %387, %388 : vector<2x8xf32>
    %390 = arith.mulf %38, %14 : vector<2x8xf32>
    %391 = arith.addf %389, %390 : vector<2x8xf32>
    %392 = arith.subf %13, %391 : vector<2x8xf32>
    %393 = arith.mulf %40, %12 : vector<2x8xf32>
    %394 = arith.mulf %42, %13 : vector<2x8xf32>
    %395 = arith.addf %393, %394 : vector<2x8xf32>
    %396 = arith.mulf %44, %14 : vector<2x8xf32>
    %397 = arith.addf %395, %396 : vector<2x8xf32>
    %398 = arith.subf %14, %397 : vector<2x8xf32>
    %399 = tpu.concatenate %28, %34, %40, %30, %36, %42, %32, %38, %44, %386, %392, %398 in 0 : vector<2x8xf32>, vector<2x8xf32>, vector<2x8xf32>, vector<2x8xf32>, vector<2x8xf32>, vector<2x8xf32>, vector<2x8xf32>, vector<2x8xf32>, vector<2x8xf32>, vector<2x8xf32>, vector<2x8xf32>, vector<2x8xf32> -> vector<24x8xf32>
    %c0_99 = arith.constant 0 : index
    %c0_100 = arith.constant 0 : index
    %400 = vector.load %arg5[%c0_99, %c0_100] : memref<40x256xf32, #tpu.memory_space<vmem>>, vector<8x256xf32>
    %cst_101 = arith.constant dense<0.000000e+00> : vector<24x256xf32>
    %401 = tpu.matmul %399, %400, %cst_101 {dimension_numbers = #tpu.dot_dimension_numbers<[1], [0], [0], [1], [0, 0, 1, 1], [], []>} : vector<24x8xf32>, vector<8x256xf32>, vector<24x256xf32> -> vector<24x256xf32>
    %402 = arith.mulf %70, %15 : vector<2x8xf32>
    %403 = arith.mulf %75, %16 : vector<2x8xf32>
    %404 = arith.addf %402, %403 : vector<2x8xf32>
    %405 = arith.mulf %80, %17 : vector<2x8xf32>
    %406 = arith.addf %404, %405 : vector<2x8xf32>
    %407 = arith.subf %116, %406 : vector<2x8xf32>
    %408 = arith.mulf %85, %15 : vector<2x8xf32>
    %409 = arith.mulf %90, %16 : vector<2x8xf32>
    %410 = arith.addf %408, %409 : vector<2x8xf32>
    %411 = arith.mulf %95, %17 : vector<2x8xf32>
    %412 = arith.addf %410, %411 : vector<2x8xf32>
    %413 = arith.subf %122, %412 : vector<2x8xf32>
    %414 = arith.mulf %100, %15 : vector<2x8xf32>
    %415 = arith.mulf %105, %16 : vector<2x8xf32>
    %416 = arith.addf %414, %415 : vector<2x8xf32>
    %417 = arith.mulf %110, %17 : vector<2x8xf32>
    %418 = arith.addf %416, %417 : vector<2x8xf32>
    %419 = arith.subf %128, %418 : vector<2x8xf32>
    %420 = tpu.concatenate %70, %85, %100, %75, %90, %105, %80, %95, %110, %407, %413, %419 in 0 : vector<2x8xf32>, vector<2x8xf32>, vector<2x8xf32>, vector<2x8xf32>, vector<2x8xf32>, vector<2x8xf32>, vector<2x8xf32>, vector<2x8xf32>, vector<2x8xf32>, vector<2x8xf32>, vector<2x8xf32>, vector<2x8xf32> -> vector<24x8xf32>
    %c8_102 = arith.constant 8 : index
    %c0_103 = arith.constant 0 : index
    %421 = vector.load %arg5[%c8_102, %c0_103] : memref<40x256xf32, #tpu.memory_space<vmem>>, vector<8x256xf32>
    %cst_104 = arith.constant dense<0.000000e+00> : vector<24x256xf32>
    %422 = tpu.matmul %420, %421, %cst_104 {dimension_numbers = #tpu.dot_dimension_numbers<[1], [0], [0], [1], [0, 0, 1, 1], [], []>} : vector<24x8xf32>, vector<8x256xf32>, vector<24x256xf32> -> vector<24x256xf32>
    %423 = arith.addf %401, %422 : vector<24x256xf32>
    %424 = arith.mulf %154, %18 : vector<2x8xf32>
    %425 = arith.mulf %159, %19 : vector<2x8xf32>
    %426 = arith.addf %424, %425 : vector<2x8xf32>
    %427 = arith.mulf %164, %20 : vector<2x8xf32>
    %428 = arith.addf %426, %427 : vector<2x8xf32>
    %429 = arith.subf %200, %428 : vector<2x8xf32>
    %430 = arith.mulf %169, %18 : vector<2x8xf32>
    %431 = arith.mulf %174, %19 : vector<2x8xf32>
    %432 = arith.addf %430, %431 : vector<2x8xf32>
    %433 = arith.mulf %179, %20 : vector<2x8xf32>
    %434 = arith.addf %432, %433 : vector<2x8xf32>
    %435 = arith.subf %206, %434 : vector<2x8xf32>
    %436 = arith.mulf %184, %18 : vector<2x8xf32>
    %437 = arith.mulf %189, %19 : vector<2x8xf32>
    %438 = arith.addf %436, %437 : vector<2x8xf32>
    %439 = arith.mulf %194, %20 : vector<2x8xf32>
    %440 = arith.addf %438, %439 : vector<2x8xf32>
    %441 = arith.subf %212, %440 : vector<2x8xf32>
    %442 = tpu.concatenate %154, %169, %184, %159, %174, %189, %164, %179, %194, %429, %435, %441 in 0 : vector<2x8xf32>, vector<2x8xf32>, vector<2x8xf32>, vector<2x8xf32>, vector<2x8xf32>, vector<2x8xf32>, vector<2x8xf32>, vector<2x8xf32>, vector<2x8xf32>, vector<2x8xf32>, vector<2x8xf32>, vector<2x8xf32> -> vector<24x8xf32>
    %c16_105 = arith.constant 16 : index
    %c0_106 = arith.constant 0 : index
    %443 = vector.load %arg5[%c16_105, %c0_106] : memref<40x256xf32, #tpu.memory_space<vmem>>, vector<8x256xf32>
    %cst_107 = arith.constant dense<0.000000e+00> : vector<24x256xf32>
    %444 = tpu.matmul %442, %443, %cst_107 {dimension_numbers = #tpu.dot_dimension_numbers<[1], [0], [0], [1], [0, 0, 1, 1], [], []>} : vector<24x8xf32>, vector<8x256xf32>, vector<24x256xf32> -> vector<24x256xf32>
    %445 = arith.addf %423, %444 : vector<24x256xf32>
    %446 = arith.mulf %238, %21 : vector<2x8xf32>
    %447 = arith.mulf %243, %22 : vector<2x8xf32>
    %448 = arith.addf %446, %447 : vector<2x8xf32>
    %449 = arith.mulf %248, %23 : vector<2x8xf32>
    %450 = arith.addf %448, %449 : vector<2x8xf32>
    %451 = arith.subf %284, %450 : vector<2x8xf32>
    %452 = arith.mulf %253, %21 : vector<2x8xf32>
    %453 = arith.mulf %258, %22 : vector<2x8xf32>
    %454 = arith.addf %452, %453 : vector<2x8xf32>
    %455 = arith.mulf %263, %23 : vector<2x8xf32>
    %456 = arith.addf %454, %455 : vector<2x8xf32>
    %457 = arith.subf %290, %456 : vector<2x8xf32>
    %458 = arith.mulf %268, %21 : vector<2x8xf32>
    %459 = arith.mulf %273, %22 : vector<2x8xf32>
    %460 = arith.addf %458, %459 : vector<2x8xf32>
    %461 = arith.mulf %278, %23 : vector<2x8xf32>
    %462 = arith.addf %460, %461 : vector<2x8xf32>
    %463 = arith.subf %296, %462 : vector<2x8xf32>
    %464 = tpu.concatenate %238, %253, %268, %243, %258, %273, %248, %263, %278, %451, %457, %463 in 0 : vector<2x8xf32>, vector<2x8xf32>, vector<2x8xf32>, vector<2x8xf32>, vector<2x8xf32>, vector<2x8xf32>, vector<2x8xf32>, vector<2x8xf32>, vector<2x8xf32>, vector<2x8xf32>, vector<2x8xf32>, vector<2x8xf32> -> vector<24x8xf32>
    %c24_108 = arith.constant 24 : index
    %c0_109 = arith.constant 0 : index
    %465 = vector.load %arg5[%c24_108, %c0_109] : memref<40x256xf32, #tpu.memory_space<vmem>>, vector<8x256xf32>
    %cst_110 = arith.constant dense<0.000000e+00> : vector<24x256xf32>
    %466 = tpu.matmul %464, %465, %cst_110 {dimension_numbers = #tpu.dot_dimension_numbers<[1], [0], [0], [1], [0, 0, 1, 1], [], []>} : vector<24x8xf32>, vector<8x256xf32>, vector<24x256xf32> -> vector<24x256xf32>
    %467 = arith.addf %445, %466 : vector<24x256xf32>
    %468 = arith.mulf %322, %24 : vector<2x8xf32>
    %469 = arith.mulf %327, %25 : vector<2x8xf32>
    %470 = arith.addf %468, %469 : vector<2x8xf32>
    %471 = arith.mulf %332, %26 : vector<2x8xf32>
    %472 = arith.addf %470, %471 : vector<2x8xf32>
    %473 = arith.subf %368, %472 : vector<2x8xf32>
    %474 = arith.mulf %337, %24 : vector<2x8xf32>
    %475 = arith.mulf %342, %25 : vector<2x8xf32>
    %476 = arith.addf %474, %475 : vector<2x8xf32>
    %477 = arith.mulf %347, %26 : vector<2x8xf32>
    %478 = arith.addf %476, %477 : vector<2x8xf32>
    %479 = arith.subf %374, %478 : vector<2x8xf32>
    %480 = arith.mulf %352, %24 : vector<2x8xf32>
    %481 = arith.mulf %357, %25 : vector<2x8xf32>
    %482 = arith.addf %480, %481 : vector<2x8xf32>
    %483 = arith.mulf %362, %26 : vector<2x8xf32>
    %484 = arith.addf %482, %483 : vector<2x8xf32>
    %485 = arith.subf %380, %484 : vector<2x8xf32>
    %486 = tpu.concatenate %322, %337, %352, %327, %342, %357, %332, %347, %362, %473, %479, %485 in 0 : vector<2x8xf32>, vector<2x8xf32>, vector<2x8xf32>, vector<2x8xf32>, vector<2x8xf32>, vector<2x8xf32>, vector<2x8xf32>, vector<2x8xf32>, vector<2x8xf32>, vector<2x8xf32>, vector<2x8xf32>, vector<2x8xf32> -> vector<24x8xf32>
    %c32_111 = arith.constant 32 : index
    %c0_112 = arith.constant 0 : index
    %487 = vector.load %arg5[%c32_111, %c0_112] : memref<40x256xf32, #tpu.memory_space<vmem>>, vector<8x256xf32>
    %cst_113 = arith.constant dense<0.000000e+00> : vector<24x256xf32>
    %488 = tpu.matmul %486, %487, %cst_113 {dimension_numbers = #tpu.dot_dimension_numbers<[1], [0], [0], [1], [0, 0, 1, 1], [], []>} : vector<24x8xf32>, vector<8x256xf32>, vector<24x256xf32> -> vector<24x256xf32>
    %489 = arith.addf %467, %488 : vector<24x256xf32>
    %490 = tpu.concatenate %6, %6, %6 in 0 : vector<2x256xf32>, vector<2x256xf32>, vector<2x256xf32> -> vector<6x256xf32>
    %491 = tpu.concatenate %7, %7, %7 in 0 : vector<2x256xf32>, vector<2x256xf32>, vector<2x256xf32> -> vector<6x256xf32>
    %492 = tpu.concatenate %8, %8, %8 in 0 : vector<2x256xf32>, vector<2x256xf32>, vector<2x256xf32> -> vector<6x256xf32>
    %493 = vector.extract_strided_slice %489 {offsets = [0, 0], sizes = [6, 256], strides = [1, 1]} : vector<24x256xf32> to vector<6x256xf32>
    %494 = arith.mulf %493, %490 : vector<6x256xf32>
    %495 = vector.extract_strided_slice %489 {offsets = [6, 0], sizes = [6, 256], strides = [1, 1]} : vector<24x256xf32> to vector<6x256xf32>
    %496 = arith.mulf %495, %491 : vector<6x256xf32>
    %497 = arith.addf %494, %496 : vector<6x256xf32>
    %498 = vector.extract_strided_slice %489 {offsets = [12, 0], sizes = [6, 256], strides = [1, 1]} : vector<24x256xf32> to vector<6x256xf32>
    %499 = arith.mulf %498, %492 : vector<6x256xf32>
    %500 = arith.addf %497, %499 : vector<6x256xf32>
    %501 = vector.extract_strided_slice %489 {offsets = [18, 0], sizes = [6, 256], strides = [1, 1]} : vector<24x256xf32> to vector<6x256xf32>
    %502 = arith.addf %500, %501 : vector<6x256xf32>
    %c0_114 = arith.constant 0 : index
    %c0_115 = arith.constant 0 : index
    %503 = vector.load %arg6[%c0_114, %c0_115] : memref<6x256xf32, #tpu.memory_space<vmem>>, vector<6x256xf32>
    tpu.vector_store %arg6[%c0_114, %c0_115], %502 {strides = array<i32>} : memref<6x256xf32, #tpu.memory_space<vmem>>, vector<6x256xf32>,
    %504 = tpu.concatenate %12, %13, %14, %116, %122, %128, %200, %206, %212, %284, %290, %296, %368, %374, %380 in 0 : vector<2x8xf32>, vector<2x8xf32>, vector<2x8xf32>, vector<2x8xf32>, vector<2x8xf32>, vector<2x8xf32>, vector<2x8xf32>, vector<2x8xf32>, vector<2x8xf32>, vector<2x8xf32>, vector<2x8xf32>, vector<2x8xf32>, vector<2x8xf32>, vector<2x8xf32>, vector<2x8xf32> -> vector<30x8xf32>
    %c0_116 = arith.constant 0 : index
    %c0_117 = arith.constant 0 : index
    %505 = vector.load %arg7[%c0_116, %c0_117] : memref<30x8xf32, #tpu.memory_space<vmem>>, vector<30x8xf32>
    tpu.vector_store %arg7[%c0_116, %c0_117], %504 {strides = array<i32>} : memref<30x8xf32, #tpu.memory_space<vmem>>, vector<30x8xf32>,
    return
  }
}

</mosaic_0001>

<llo_original>
// kernel: _lambda_.1
$region0: #{_lambda_.1}
  #allocation0 [shape = 'u32[]', space=smem, size = 0x4, offset = 0x4, fixed_abs, tag = 'smem constant byte address 0x4 - core index']
  #allocation1 [shape = 'u32[144,128]{1,0:T(1,128)}', space=vmem, size = 0x12000, scoped, tag = 'internal scratch']
  %s0 = inlined_call_operand.vmem [shape: f32[2,35], index: 0, kind: input, shape index: {}]
  %s1 = inlined_call_operand.vmem [shape: f32[45,2,8], index: 1, kind: input, shape index: {}]
  %s2 = inlined_call_operand.vmem [shape: f32[35,768], index: 2, kind: input, shape index: {}]
  %s3 = inlined_call_operand.vmem [shape: f32[1,768], index: 3, kind: input, shape index: {}]
  %s4 = inlined_call_operand.vmem [shape: f32[256,40], index: 4, kind: input, shape index: {}]
  %s5 = inlined_call_operand.vmem [shape: f32[40,256], index: 5, kind: input, shape index: {}]
  %s6 = inlined_call_operand.vmem [shape: f32[6,256], index: 6, kind: output, shape index: {0}]
  %s7 = inlined_call_operand.vmem [shape: f32[30,8], index: 7, kind: output, shape index: {1}]
  %8 = xla_tuple %s6, %s7
  %s9 = sld [smem:[#allocation0]]
  $region42: #{_lambda_.1} parent=0
    _
  %s11 = ssub.s32 1, %s9
  %s12 = scalar_select 0, %s11, %s9
  // Predicated region
  $region2: #{_lambda_.1} parent=0 // pred_check
    _
  $region3: #{_lambda_.1} parent=0 // pred_check_branch
    %14 = sbr.rel (0) target = $region5
  $region4: #{_lambda_.1} parent=0 // pred_region
    _
  $region5: #{_lambda_.1} parent=0 // pred_fallthru
    _
  // Predicated region
  $region6: #{_lambda_.1} parent=0 // pred_check
    _
  $region7: #{_lambda_.1} parent=0 // pred_check_branch
    %16 = sbr.rel (0) target = $region9
  $region8: #{_lambda_.1} parent=0 // pred_region
    _
  $region9: #{_lambda_.1} parent=0 // pred_fallthru
    _
  // Predicated region
  $region10: #{_lambda_.1} parent=0 // pred_check
    _
  $region11: #{_lambda_.1} parent=0 // pred_check_branch
    %18 = sbr.rel (0) target = $region13
  $region12: #{_lambda_.1} parent=0 // pred_region
    _
  $region13: #{_lambda_.1} parent=0 // pred_fallthru
    _
  // Predicated region
  $region14: #{_lambda_.1} parent=0 // pred_check
    _
  $region15: #{_lambda_.1} parent=0 // pred_check_branch
    %20 = sbr.rel (0) target = $region17
  $region16: #{_lambda_.1} parent=0 // pred_region
    _
  $region17: #{_lambda_.1} parent=0 // pred_fallthru
    _
  // Predicated region
  $region18: #{_lambda_.1} parent=0 // pred_check
    _
  $region19: #{_lambda_.1} parent=0 // pred_check_branch
    %22 = sbr.rel (0) target = $region21
  $region20: #{_lambda_.1} parent=0 // pred_region
    _
  $region21: #{_lambda_.1} parent=0 // pred_fallthru
    _
  // Predicated region
  $region22: #{_lambda_.1} parent=0 // pred_check
    _
  $region23: #{_lambda_.1} parent=0 // pred_check_branch
    %24 = sbr.rel (0) target = $region25
  $region24: #{_lambda_.1} parent=0 // pred_region
    _
  $region25: #{_lambda_.1} parent=0 // pred_fallthru
    _
  %v25 = vld [vmem:[%s0] sm:$0x3]
  %v26 = vld [vmem:[%s2] sm:$0xff]
  %v27 = vld [vmem:[%s2 + $0x8] sm:$0xff]
  %v28 = vld [vmem:[%s2 + $0x10] sm:$0xff]
  %v29 = vld [vmem:[%s2 + $0x18] sm:$0xff]
  %v30 = vld [vmem:[%s2 + $0x20] sm:$0xff]
  %v31 = vld [vmem:[%s2 + $0x28] sm:$0xff]
  %v32 = vld [vmem:[%s2 + $0x30] sm:$0xff]
  %v33 = vld [vmem:[%s2 + $0x38] sm:$0xff]
  %v34 = vld [vmem:[%s2 + $0x40] sm:$0xff]
  %v35 = vld [vmem:[%s2 + $0x48] sm:$0xff]
  %v36 = vld [vmem:[%s2 + $0x50] sm:$0xff]
  %v37 = vld [vmem:[%s2 + $0x58] sm:$0xff]
  %v38 = vld [vmem:[%s2 + $0x60] sm:$0xff]
  %v39 = vld [vmem:[%s2 + $0x68] sm:$0xff]
  %v40 = vld [vmem:[%s2 + $0x70] sm:$0xff]
  %v41 = vld [vmem:[%s2 + $0x78] sm:$0xff]
  %v42 = vld [vmem:[%s2 + $0x80] sm:$0xff]
  %v43 = vld [vmem:[%s2 + $0x88] sm:$0xff]
  %v44 = vld [vmem:[%s2 + $0x90] sm:$0xff]
  %v45 = vld [vmem:[%s2 + $0x98] sm:$0xff]
  %v46 = vld [vmem:[%s2 + $0xa0] sm:$0xff]
  %v47 = vld [vmem:[%s2 + $0xa8] sm:$0xff]
  %v48 = vld [vmem:[%s2 + $0xb0] sm:$0xff]
  %v49 = vld [vmem:[%s2 + $0xb8] sm:$0xff]
  %v50 = vld [vmem:[%s2 + $0xc0] sm:$0x7]
  %v51 = vld [vmem:[%s2 + $0xc8] sm:$0x7]
  %v52 = vld [vmem:[%s2 + $0xd0] sm:$0x7]
  %v53 = vld [vmem:[%s2 + $0xd8] sm:$0x7]
  %v54 = vld [vmem:[%s2 + $0xe0] sm:$0x7]
  %v55 = vld [vmem:[%s2 + $0xe8] sm:$0x7]
  %v56 = vld [vmem:[%s3] sm:$0x3f]
  %v58 = vlaneseq
  %v59 = vshrl.u32 %v58, 7
  %v60 = vsub.s32 0, %v59
  %v61 = vrot.slane %v56, %v60
  %v62 = vlaneseq
  %v63 = vshrl.u32 %v62, 7
  %v64 = vsub.s32 1, %v63
  %v65 = vrot.slane %v56, %v64
  %v66 = vlaneseq
  %v67 = vshrl.u32 %v66, 7
  %v68 = vsub.s32 2, %v67
  %v69 = vrot.slane %v56, %v68
  %v70 = vlaneseq
  %v71 = vshrl.u32 %v70, 7
  %v72 = vsub.s32 3, %v71
  %v73 = vrot.slane %v56, %v72
  %v74 = vlaneseq
  %v75 = vshrl.u32 %v74, 7
  %v76 = vsub.s32 4, %v75
  %v77 = vrot.slane %v56, %v76
  %v78 = vlaneseq
  %v79 = vshrl.u32 %v78, 7
  %v80 = vsub.s32 5, %v79
  %v81 = vrot.slane %v56, %v80
  %vm88 = vcmask 285696
  %v90 = vsel %vm88, %v25, 0
  %vm92 = vcmask 1042432
  %v94 = vsel %vm92, %v50, 0
  %v97 = vsel %vm92, %v51, 0
  %v100 = vsel %vm92, %v52, 0
  %v103 = vsel %vm92, %v53, 0
  %v106 = vsel %vm92, %v54, 0
  %v109 = vsel %vm92, %v55, 0
  %111 = vmatprep.subr.mxu0 %v27
  %112 = vmatpush1.msra.mxu0 %v26
  %113 = vmatprep.subr.mxu0 %v33
  %114 = vmatpush1.msra.mxu0 %v32
  %115 = vmatprep.subr.mxu0 %v39
  %116 = vmatpush1.msra.mxu0 %v38
  %117 = vmatprep.subr.mxu0 %v45
  %118 = vmatpush1.msra.mxu0 %v44
  %119 = vmatprep.subr.mxu0 %v97
  %120 = vmatpush1.msra.mxu0 %v94
  %121 = vmatprep.subr.mxu0 0.0
  %122 = vmatpush1.msra.mxu0 0.0
  %123 = vmatprep.subr.mxu0 0.0
  %124 = vmatpush1.msra.mxu0 0.0
  %125 = vmatprep.subr.mxu0 0.0
  %126 = vmatpush1.msra.mxu0 0.0
  %127 = vmatprep.subr.mxu0 0.0
  %128 = vmatpush1.msra.mxu0 0.0
  %129 = vmatprep.subr.mxu0 0.0
  %130 = vmatpush1.msra.mxu0 0.0
  %131 = vmatprep.subr.mxu0 0.0
  %132 = vmatpush1.msra.mxu0 0.0
  %133 = vmatprep.subr.mxu0 0.0
  %134 = vmatpush1.msra.mxu0 0.0
  %135 = vmatprep.subr.mxu0 0.0
  %136 = vmatpush1.msra.mxu0 0.0
  %137 = vmatprep.subr.mxu0 0.0
  %138 = vmatpush1.msra.mxu0 0.0
  %139 = vmatprep.subr.mxu0 0.0
  %140 = vmatpush1.msra.mxu0 0.0
  %141 = vmatprep.subr.mxu0 0.0
  %142 = vmatpush1.msra.mxu0 0.0
  %143 = vmatprep.subr.mxu0 0.0
  %144 = vmatpush1.msra.mxu0 0.0
  %145 = vmatprep.subr.mxu0 0.0
  %146 = vmatpush1.msra.mxu0 0.0
  %147 = vmatprep.subr.mxu0 0.0
  %148 = vmatpush1.msra.mxu0 0.0
  %149 = vmatprep.subr.mxu0 0.0
  %150 = vmatpush1.msra.mxu0 0.0
  %151 = vmatprep.subr.mxu0 0.0
  %152 = vmatpush1.msra.mxu0 0.0
  %153 = vmatprep.subr.mxu0 0.0
  %154 = vmatpush1.msra.mxu0 0.0
  %155 = vmatprep.subr.mxu0 0.0
  %156 = vmatpush1.msra.mxu0 0.0
  %157 = vmatprep.subr.mxu0 0.0
  %158 = vmatpush1.msra.mxu0 0.0
  %159 = vmatprep.subr.mxu0 0.0
  %160 = vmatpush1.msra.mxu0 0.0
  %161 = vmatprep.subr.mxu0 0.0
  %162 = vmatpush1.msra.mxu0 0.0
  %163 = vmatprep.subr.mxu0 0.0
  %164 = vmatpush1.msra.mxu0 0.0
  %165 = vmatprep.subr.mxu0 0.0
  %166 = vmatpush1.msra.mxu0 0.0
  %167 = vmatprep.subr.mxu0 0.0
  %168 = vmatpush1.msra.mxu0 0.0
  %169 = vmatprep.subr.mxu0 0.0
  %170 = vmatpush1.msra.mxu0 0.0
  %171 = vmatprep.subr.mxu0 0.0
  %172 = vmatpush1.msra.mxu0 0.0
  %173 = vmatprep.subr.mxu0 0.0
  %174 = vmatpush1.msra.mxu0 0.0
  %175 = vmatprep.mubr.f32.mxu0 0.0
  %176 = vmatmul.mubr.f32.gmra.mrb[0].mxu0 %v90
  %v177 = vpop.f32.mrb[0].mxu0
  %v178 = vadd.f32 %v61, %v177
  %v179 = vpop.f32.mrb[0].mxu0
  %v180 = vadd.f32 %v65, %v179
  %181 = vdwg.mxu0
  %182 = vmatprep.subr.mxu0 %v29
  %183 = vmatpush1.msra.mxu0 %v28
  %184 = vmatprep.subr.mxu0 %v35
  %185 = vmatpush1.msra.mxu0 %v34
  %186 = vmatprep.subr.mxu0 %v41
  %187 = vmatpush1.msra.mxu0 %v40
  %188 = vmatprep.subr.mxu0 %v47
  %189 = vmatpush1.msra.mxu0 %v46
  %190 = vmatprep.subr.mxu0 %v103
  %191 = vmatpush1.msra.mxu0 %v100
  %192 = vmatprep.subr.mxu0 0.0
  %193 = vmatpush1.msra.mxu0 0.0
  %194 = vmatprep.subr.mxu0 0.0
  %195 = vmatpush1.msra.mxu0 0.0
  %196 = vmatprep.subr.mxu0 0.0
  %197 = vmatpush1.msra.mxu0 0.0
  %198 = vmatprep.subr.mxu0 0.0
  %199 = vmatpush1.msra.mxu0 0.0
  %200 = vmatprep.subr.mxu0 0.0
  %201 = vmatpush1.msra.mxu0 0.0
  %202 = vmatprep.subr.mxu0 0.0
  %203 = vmatpush1.msra.mxu0 0.0
  %204 = vmatprep.subr.mxu0 0.0
  %205 = vmatpush1.msra.mxu0 0.0
  %206 = vmatprep.subr.mxu0 0.0
  %207 = vmatpush1.msra.mxu0 0.0
  %208 = vmatprep.subr.mxu0 0.0
  %209 = vmatpush1.msra.mxu0 0.0
  %210 = vmatprep.subr.mxu0 0.0
  %211 = vmatpush1.msra.mxu0 0.0
  %212 = vmatprep.subr.mxu0 0.0
  %213 = vmatpush1.msra.mxu0 0.0
  %214 = vmatprep.subr.mxu0 0.0
  %215 = vmatpush1.msra.mxu0 0.0
  %216 = vmatprep.subr.mxu0 0.0
  %217 = vmatpush1.msra.mxu0 0.0
  %218 = vmatprep.subr.mxu0 0.0
  %219 = vmatpush1.msra.mxu0 0.0
  %220 = vmatprep.subr.mxu0 0.0
  %221 = vmatpush1.msra.mxu0 0.0
  %222 = vmatprep.subr.mxu0 0.0
  %223 = vmatpush1.msra.mxu0 0.0
  %224 = vmatprep.subr.mxu0 0.0
  %225 = vmatpush1.msra.mxu0 0.0
  %226 = vmatprep.subr.mxu0 0.0
  %227 = vmatpush1.msra.mxu0 0.0
  %228 = vmatprep.subr.mxu0 0.0
  %229 = vmatpush1.msra.mxu0 0.0
  %230 = vmatprep.subr.mxu0 0.0
  %231 = vmatpush1.msra.mxu0 0.0
  %232 = vmatprep.subr.mxu0 0.0
  %233 = vmatpush1.msra.mxu0 0.0
  %234 = vmatprep.subr.mxu0 0.0
  %235 = vmatpush1.msra.mxu0 0.0
  %236 = vmatprep.subr.mxu0 0.0
  %237 = vmatpush1.msra.mxu0 0.0
  %238 = vmatprep.subr.mxu0 0.0
  %239 = vmatpush1.msra.mxu0 0.0
  %240 = vmatprep.subr.mxu0 0.0
  %241 = vmatpush1.msra.mxu0 0.0
  %242 = vmatprep.subr.mxu0 0.0
  %243 = vmatpush1.msra.mxu0 0.0
  %244 = vmatprep.subr.mxu0 0.0
  %245 = vmatpush1.msra.mxu0 0.0
  %246 = vmatprep.mubr.f32.mxu0 0.0
  %247 = vmatmul.mubr.f32.gmra.mrb[0].mxu0 %v90
  %v248 = vpop.f32.mrb[0].mxu0
  %v249 = vadd.f32 %v69, %v248
  %v250 = vpop.f32.mrb[0].mxu0
  %v251 = vadd.f32 %v73, %v250
  %252 = vdwg.mxu0
  %253 = vmatprep.subr.mxu0 %v31
  %254 = vmatpush1.msra.mxu0 %v30
  %255 = vmatprep.subr.mxu0 %v37
  %256 = vmatpush1.msra.mxu0 %v36
  %257 = vmatprep.subr.mxu0 %v43
  %258 = vmatpush1.msra.mxu0 %v42
  %259 = vmatprep.subr.mxu0 %v49
  %260 = vmatpush1.msra.mxu0 %v48
  %261 = vmatprep.subr.mxu0 %v109
  %262 = vmatpush1.msra.mxu0 %v106
  %263 = vmatprep.subr.mxu0 0.0
  %264 = vmatpush1.msra.mxu0 0.0
  %265 = vmatprep.subr.mxu0 0.0
  %266 = vmatpush1.msra.mxu0 0.0
  %267 = vmatprep.subr.mxu0 0.0
  %268 = vmatpush1.msra.mxu0 0.0
  %269 = vmatprep.subr.mxu0 0.0
  %270 = vmatpush1.msra.mxu0 0.0
  %271 = vmatprep.subr.mxu0 0.0
  %272 = vmatpush1.msra.mxu0 0.0
  %273 = vmatprep.subr.mxu0 0.0
  %274 = vmatpush1.msra.mxu0 0.0
  %275 = vmatprep.subr.mxu0 0.0
  %276 = vmatpush1.msra.mxu0 0.0
  %277 = vmatprep.subr.mxu0 0.0
  %278 = vmatpush1.msra.mxu0 0.0
  %279 = vmatprep.subr.mxu0 0.0
  %280 = vmatpush1.msra.mxu0 0.0
  %281 = vmatprep.subr.mxu0 0.0
  %282 = vmatpush1.msra.mxu0 0.0
  %283 = vmatprep.subr.mxu0 0.0
  %284 = vmatpush1.msra.mxu0 0.0
  %285 = vmatprep.subr.mxu0 0.0
  %286 = vmatpush1.msra.mxu0 0.0
  %287 = vmatprep.subr.mxu0 0.0
  %288 = vmatpush1.msra.mxu0 0.0
  %289 = vmatprep.subr.mxu0 0.0
  %290 = vmatpush1.msra.mxu0 0.0
  %291 = vmatprep.subr.mxu0 0.0
  %292 = vmatpush1.msra.mxu0 0.0
  %293 = vmatprep.subr.mxu0 0.0
  %294 = vmatpush1.msra.mxu0 0.0
  %295 = vmatprep.subr.mxu0 0.0
  %296 = vmatpush1.msra.mxu0 0.0
  %297 = vmatprep.subr.mxu0 0.0
  %298 = vmatpush1.msra.mxu0 0.0
  %299 = vmatprep.subr.mxu0 0.0
  %300 = vmatpush1.msra.mxu0 0.0
  %301 = vmatprep.subr.mxu0 0.0
  %302 = vmatpush1.msra.mxu0 0.0
  %303 = vmatprep.subr.mxu0 0.0
  %304 = vmatpush1.msra.mxu0 0.0
  %305 = vmatprep.subr.mxu0 0.0
  %306 = vmatpush1.msra.mxu0 0.0
  %307 = vmatprep.subr.mxu0 0.0
  %308 = vmatpush1.msra.mxu0 0.0
  %309 = vmatprep.subr.mxu0 0.0
  %310 = vmatpush1.msra.mxu0 0.0
  %311 = vmatprep.subr.mxu0 0.0
  %312 = vmatpush1.msra.mxu0 0.0
  %313 = vmatprep.subr.mxu0 0.0
  %314 = vmatpush1.msra.mxu0 0.0
  %315 = vmatprep.subr.mxu0 0.0
  %316 = vmatpush1.msra.mxu0 0.0
  %317 = vmatprep.mubr.f32.mxu0 0.0
  %318 = vmatmul.mubr.f32.gmra.mrb[0].mxu0 %v90
  %v319 = vpop.f32.mrb[0].mxu0
  %v320 = vadd.f32 %v77, %v319
  %v321 = vpop.f32.mrb[0].mxu0
  %v322 = vadd.f32 %v81, %v321
  %323 = vdwg.mxu0
  %v326 = vrot.slane %v249, 6
  %v327 = vrot.slane %v251, 6
  %v332 = vrot.slane %v320, 4
  %v333 = vrot.slane %v322, 4
  %vm336 = vcmask 1041408
  %v337 = vsel %vm336, %v178, %v326
  %v338 = vsel %vm336, %v180, %v327
  %vm339 = vcmask 1043456
  %v340 = vsel %vm339, %v337, %v332
  %v341 = vsel %vm339, %v338, %v333
  %v342 = vld [vmem:[%s4] sm:$0xff]
  %v343 = vld [vmem:[%s4 + $0x8] sm:$0xff]
  %v344 = vld [vmem:[%s4 + $0x10] sm:$0xff]
  %v345 = vld [vmem:[%s4 + $0x18] sm:$0xff]
  %v346 = vld [vmem:[%s4 + $0x20] sm:$0xff]
  %v347 = vld [vmem:[%s4 + $0x28] sm:$0xff]
  %v348 = vld [vmem:[%s4 + $0x30] sm:$0xff]
  %v349 = vld [vmem:[%s4 + $0x38] sm:$0xff]
  %v350 = vld [vmem:[%s4 + $0x40] sm:$0xff]
  %v351 = vld [vmem:[%s4 + $0x48] sm:$0xff]
  %v352 = vld [vmem:[%s4 + $0x50] sm:$0xff]
  %v353 = vld [vmem:[%s4 + $0x58] sm:$0xff]
  %v354 = vld [vmem:[%s4 + $0x60] sm:$0xff]
  %v355 = vld [vmem:[%s4 + $0x68] sm:$0xff]
  %v356 = vld [vmem:[%s4 + $0x70] sm:$0xff]
  %v357 = vld [vmem:[%s4 + $0x78] sm:$0xff]
  %v358 = vld [vmem:[%s4 + $0x80] sm:$0xff]
  %v359 = vld [vmem:[%s4 + $0x88] sm:$0xff]
  %v360 = vld [vmem:[%s4 + $0x90] sm:$0xff]
  %v361 = vld [vmem:[%s4 + $0x98] sm:$0xff]
  %v362 = vld [vmem:[%s4 + $0xa0] sm:$0xff]
  %v363 = vld [vmem:[%s4 + $0xa8] sm:$0xff]
  %v364 = vld [vmem:[%s4 + $0xb0] sm:$0xff]
  %v365 = vld [vmem:[%s4 + $0xb8] sm:$0xff]
  %v366 = vld [vmem:[%s4 + $0xc0] sm:$0xff]
  %v367 = vld [vmem:[%s4 + $0xc8] sm:$0xff]
  %v368 = vld [vmem:[%s4 + $0xd0] sm:$0xff]
  %v369 = vld [vmem:[%s4 + $0xd8] sm:$0xff]
  %v370 = vld [vmem:[%s4 + $0xe0] sm:$0xff]
  %v371 = vld [vmem:[%s4 + $0xe8] sm:$0xff]
  %v372 = vld [vmem:[%s4 + $0xf0] sm:$0xff]
  %v373 = vld [vmem:[%s4 + $0xf8] sm:$0xff]
  %374 = vmatprep.subr.mxu0 0.0
  %375 = vmatpush1.msra.mxu0 %v342
  %376 = vmatprep.subr.mxu0 0.0
  %377 = vmatpush1.msra.mxu0 %v343
  %378 = vmatprep.subr.mxu0 0.0
  %379 = vmatpush1.msra.mxu0 %v344
  %380 = vmatprep.subr.mxu0 0.0
  %381 = vmatpush1.msra.mxu0 %v345
  %382 = vmatprep.subr.mxu0 0.0
  %383 = vmatpush1.msra.mxu0 %v346
  %384 = vmatprep.subr.mxu0 0.0
  %385 = vmatpush1.msra.mxu0 %v347
  %386 = vmatprep.subr.mxu0 0.0
  %387 = vmatpush1.msra.mxu0 %v348
  %388 = vmatprep.subr.mxu0 0.0
  %389 = vmatpush1.msra.mxu0 %v349
  %390 = vmatprep.subr.mxu0 0.0
  %391 = vmatpush1.msra.mxu0 %v350
  %392 = vmatprep.subr.mxu0 0.0
  %393 = vmatpush1.msra.mxu0 %v351
  %394 = vmatprep.subr.mxu0 0.0
  %395 = vmatpush1.msra.mxu0 %v352
  %396 = vmatprep.subr.mxu0 0.0
  %397 = vmatpush1.msra.mxu0 %v353
  %398 = vmatprep.subr.mxu0 0.0
  %399 = vmatpush1.msra.mxu0 %v354
  %400 = vmatprep.subr.mxu0 0.0
  %401 = vmatpush1.msra.mxu0 %v355
  %402 = vmatprep.subr.mxu0 0.0
  %403 = vmatpush1.msra.mxu0 %v356
  %404 = vmatprep.subr.mxu0 0.0
  %405 = vmatpush1.msra.mxu0 %v357
  %406 = vmatprep.subr.mxu0 0.0
  %407 = vmatpush1.msra.mxu0 %v358
  %408 = vmatprep.subr.mxu0 0.0
  %409 = vmatpush1.msra.mxu0 %v359
  %410 = vmatprep.subr.mxu0 0.0
  %411 = vmatpush1.msra.mxu0 %v360
  %412 = vmatprep.subr.mxu0 0.0
  %413 = vmatpush1.msra.mxu0 %v361
  %414 = vmatprep.subr.mxu0 0.0
  %415 = vmatpush1.msra.mxu0 %v362
  %416 = vmatprep.subr.mxu0 0.0
  %417 = vmatpush1.msra.mxu0 %v363
  %418 = vmatprep.subr.mxu0 0.0
  %419 = vmatpush1.msra.mxu0 %v364
  %420 = vmatprep.subr.mxu0 0.0
  %421 = vmatpush1.msra.mxu0 %v365
  %422 = vmatprep.subr.mxu0 0.0
  %423 = vmatpush1.msra.mxu0 %v366
  %424 = vmatprep.subr.mxu0 0.0
  %425 = vmatpush1.msra.mxu0 %v367
  %426 = vmatprep.subr.mxu0 0.0
  %427 = vmatpush1.msra.mxu0 %v368
  %428 = vmatprep.subr.mxu0 0.0
  %429 = vmatpush1.msra.mxu0 %v369
  %430 = vmatprep.subr.mxu0 0.0
  %431 = vmatpush1.msra.mxu0 %v370
  %432 = vmatprep.subr.mxu0 0.0
  %433 = vmatpush1.msra.mxu0 %v371
  %434 = vmatprep.subr.mxu0 0.0
  %435 = vmatpush1.msra.mxu0 %v372
  %436 = vmatprep.subr.mxu0 0.0
  %437 = vmatpush1.msra.mxu0 %v373
  %438 = vmatprep.mubr.f32.mxu0 %v341
  %439 = vmatmul.mubr.f32.gmra.mrb[0].mxu0 %v340
  %v440 = vpop.f32.mrb[0].mxu0
  %v441 = vadd.f32 0.0, %v440
  %v442 = vpop.f32.mrb[0].mxu0
  %443 = vdwg.mxu0
  %v444 = vld [vmem:[%s1] sm:$0x3]
  %s445 = scalar_lea.vmem %s1, 2
  %v446 = vld [vmem:[%s445] sm:$0x3]
  %s447 = scalar_lea.vmem %s1, 4
  %v448 = vld [vmem:[%s447] sm:$0x3]
  %s449 = scalar_lea.vmem %s1, 6
  %v450 = vld [vmem:[%s449] sm:$0x3]
  %s451 = scalar_lea.vmem %s1, 8
  %v452 = vld [vmem:[%s451] sm:$0x3]
  %s453 = scalar_lea.vmem %s1, 10
  %v454 = vld [vmem:[%s453] sm:$0x3]
  %s455 = scalar_lea.vmem %s1, 12
  %v456 = vld [vmem:[%s455] sm:$0x3]
  %s457 = scalar_lea.vmem %s1, 14
  %v458 = vld [vmem:[%s457] sm:$0x3]
  %s459 = scalar_lea.vmem %s1, 16
  %v460 = vld [vmem:[%s459] sm:$0x3]
  %s461 = scalar_lea.vmem %s1, 18
  %v462 = vld [vmem:[%s461] sm:$0x3]
  %s463 = scalar_lea.vmem %s1, 20
  %v464 = vld [vmem:[%s463] sm:$0x3]
  %s465 = scalar_lea.vmem %s1, 22
  %v466 = vld [vmem:[%s465] sm:$0x3]
  %s467 = scalar_lea.vmem %s1, 24
  %v468 = vld [vmem:[%s467] sm:$0x3]
  %s469 = scalar_lea.vmem %s1, 26
  %v470 = vld [vmem:[%s469] sm:$0x3]
  %s471 = scalar_lea.vmem %s1, 28
  %v472 = vld [vmem:[%s471] sm:$0x3]
  %s473 = scalar_lea.vmem %s1, 30
  %v474 = vld [vmem:[%s473] sm:$0x3]
  %s475 = scalar_lea.vmem %s1, 32
  %v476 = vld [vmem:[%s475] sm:$0x3]
  %s477 = scalar_lea.vmem %s1, 34
  %v478 = vld [vmem:[%s477] sm:$0x3]
  %480 = vrot.lane.b32.xlu0 %v441, 8
  %v481 = vpop.permute.xlu0 %480
  %v483 = vsub.f32 %v441, %v481
  %v484 = vmul.f32 %v444, %v462
  %v485 = vmul.f32 %v446, %v468
  %v486 = vadd.f32 %v484, %v485
  %v487 = vmul.f32 %v448, %v474
  %v488 = vadd.f32 %v486, %v487
  %v489 = vmul.f32 %v444, %v464
  %v490 = vmul.f32 %v446, %v470
  %v491 = vadd.f32 %v489, %v490
  %v492 = vmul.f32 %v448, %v476
  %v493 = vadd.f32 %v491, %v492
  %v494 = vmul.f32 %v444, %v466
  %v495 = vmul.f32 %v446, %v472
  %v496 = vadd.f32 %v494, %v495
  %v497 = vmul.f32 %v448, %v478
  %v498 = vadd.f32 %v496, %v497
  %v499 = vmul.f32 %v450, %v462
  %v500 = vmul.f32 %v452, %v468
  %v501 = vadd.f32 %v499, %v500
  %v502 = vmul.f32 %v454, %v474
  %v503 = vadd.f32 %v501, %v502
  %v504 = vmul.f32 %v450, %v464
  %v505 = vmul.f32 %v452, %v470
  %v506 = vadd.f32 %v504, %v505
  %v507 = vmul.f32 %v454, %v476
  %v508 = vadd.f32 %v506, %v507
  %v509 = vmul.f32 %v450, %v466
  %v510 = vmul.f32 %v452, %v472
  %v511 = vadd.f32 %v509, %v510
  %v512 = vmul.f32 %v454, %v478
  %v513 = vadd.f32 %v511, %v512
  %v514 = vmul.f32 %v456, %v462
  %v515 = vmul.f32 %v458, %v468
  %v516 = vadd.f32 %v514, %v515
  %v517 = vmul.f32 %v460, %v474
  %v518 = vadd.f32 %v516, %v517
  %v519 = vmul.f32 %v456, %v464
  %v520 = vmul.f32 %v458, %v470
  %v521 = vadd.f32 %v519, %v520
  %v522 = vmul.f32 %v460, %v476
  %v523 = vadd.f32 %v521, %v522
  %v524 = vmul.f32 %v456, %v466
  %v525 = vmul.f32 %v458, %v472
  %v526 = vadd.f32 %v524, %v525
  %v527 = vmul.f32 %v460, %v478
  %v528 = vadd.f32 %v526, %v527
  %530 = vrot.lane.b32.xlu0 %v483, 120
  %v531 = vpop.permute.xlu0 %530
  %v533 = vmul.f32 %v444, %v531
  %v534 = vrot.slane %v483, 2
  %535 = vrot.lane.b32.xlu0 %v534, 120
  %v536 = vpop.permute.xlu0 %535
  %v538 = vmul.f32 %v446, %v536
  %v539 = vadd.f32 %v533, %v538
  %v540 = vrot.slane %v483, 4
  %541 = vrot.lane.b32.xlu0 %v540, 120
  %v542 = vpop.permute.xlu0 %541
  %v544 = vmul.f32 %v448, %v542
  %v545 = vadd.f32 %v539, %v544
  %v546 = vadd.f32 %v545, %v441
  %v547 = vmul.f32 %v450, %v531
  %v548 = vmul.f32 %v452, %v536
  %v549 = vadd.f32 %v547, %v548
  %v550 = vmul.f32 %v454, %v542
  %v551 = vadd.f32 %v549, %v550
  %v552 = vrot.slane %v441, 2
  %v554 = vadd.f32 %v551, %v552
  %v555 = vmul.f32 %v456, %v531
  %v556 = vmul.f32 %v458, %v536
  %v557 = vadd.f32 %v555, %v556
  %v558 = vmul.f32 %v460, %v542
  %v559 = vadd.f32 %v557, %v558
  %v560 = vrot.slane %v441, 4
  %v562 = vadd.f32 %v559, %v560
  %s563 = scalar_lea.vmem %s1, 36
  %v564 = vld [vmem:[%s563] sm:$0x3]
  %s565 = scalar_lea.vmem %s1, 38
  %v566 = vld [vmem:[%s565] sm:$0x3]
  %s567 = scalar_lea.vmem %s1, 40
  %v568 = vld [vmem:[%s567] sm:$0x3]
  %s569 = scalar_lea.vmem %s1, 42
  %v570 = vld [vmem:[%s569] sm:$0x3]
  %s571 = scalar_lea.vmem %s1, 44
  %v572 = vld [vmem:[%s571] sm:$0x3]
  %s573 = scalar_lea.vmem %s1, 46
  %v574 = vld [vmem:[%s573] sm:$0x3]
  %s575 = scalar_lea.vmem %s1, 48
  %v576 = vld [vmem:[%s575] sm:$0x3]
  %s577 = scalar_lea.vmem %s1, 50
  %v578 = vld [vmem:[%s577] sm:$0x3]
  %s579 = scalar_lea.vmem %s1, 52
  %v580 = vld [vmem:[%s579] sm:$0x3]
  %v581 = vmul.f32 %v488, %v564
  %v582 = vmul.f32 %v493, %v570
  %v583 = vadd.f32 %v581, %v582
  %v584 = vmul.f32 %v498, %v576
  %v585 = vadd.f32 %v583, %v584
  %v586 = vmul.f32 %v488, %v566
  %v587 = vmul.f32 %v493, %v572
  %v588 = vadd.f32 %v586, %v587
  %v589 = vmul.f32 %v498, %v578
  %v590 = vadd.f32 %v588, %v589
  %v591 = vmul.f32 %v488, %v568
  %v592 = vmul.f32 %v493, %v574
  %v593 = vadd.f32 %v591, %v592
  %v594 = vmul.f32 %v498, %v580
  %v595 = vadd.f32 %v593, %v594
  %v596 = vmul.f32 %v503, %v564
  %v597 = vmul.f32 %v508, %v570
  %v598 = vadd.f32 %v596, %v597
  %v599 = vmul.f32 %v513, %v576
  %v600 = vadd.f32 %v598, %v599
  %v601 = vmul.f32 %v503, %v566
  %v602 = vmul.f32 %v508, %v572
  %v603 = vadd.f32 %v601, %v602
  %v604 = vmul.f32 %v513, %v578
  %v605 = vadd.f32 %v603, %v604
  %v606 = vmul.f32 %v503, %v568
  %v607 = vmul.f32 %v508, %v574
  %v608 = vadd.f32 %v606, %v607
  %v609 = vmul.f32 %v513, %v580
  %v610 = vadd.f32 %v608, %v609
  %v611 = vmul.f32 %v518, %v564
  %v612 = vmul.f32 %v523, %v570
  %v613 = vadd.f32 %v611, %v612
  %v614 = vmul.f32 %v528, %v576
  %v615 = vadd.f32 %v613, %v614
  %v616 = vmul.f32 %v518, %v566
  %v617 = vmul.f32 %v523, %v572
  %v618 = vadd.f32 %v616, %v617
  %v619 = vmul.f32 %v528, %v578
  %v620 = vadd.f32 %v618, %v619
  %v621 = vmul.f32 %v518, %v568
  %v622 = vmul.f32 %v523, %v574
  %v623 = vadd.f32 %v621, %v622
  %v624 = vmul.f32 %v528, %v580
  %v625 = vadd.f32 %v623, %v624
  %626 = vrot.lane.b32.xlu0 %v483, 112
  %v627 = vpop.permute.xlu0 %626
  %v629 = vmul.f32 %v488, %v627
  %630 = vrot.lane.b32.xlu0 %v534, 112
  %v631 = vpop.permute.xlu0 %630
  %v633 = vmul.f32 %v493, %v631
  %v634 = vadd.f32 %v629, %v633
  %635 = vrot.lane.b32.xlu0 %v540, 112
  %v636 = vpop.permute.xlu0 %635
  %v638 = vmul.f32 %v498, %v636
  %v639 = vadd.f32 %v634, %v638
  %v640 = vadd.f32 %v639, %v546
  %v641 = vmul.f32 %v503, %v627
  %v642 = vmul.f32 %v508, %v631
  %v643 = vadd.f32 %v641, %v642
  %v644 = vmul.f32 %v513, %v636
  %v645 = vadd.f32 %v643, %v644
  %v646 = vadd.f32 %v645, %v554
  %v647 = vmul.f32 %v518, %v627
  %v648 = vmul.f32 %v523, %v631
  %v649 = vadd.f32 %v647, %v648
  %v650 = vmul.f32 %v528, %v636
  %v651 = vadd.f32 %v649, %v650
  %v652 = vadd.f32 %v651, %v562
  %s653 = scalar_lea.vmem %s1, 54
  %v654 = vld [vmem:[%s653] sm:$0x3]
  %s655 = scalar_lea.vmem %s1, 56
  %v656 = vld [vmem:[%s655] sm:$0x3]
  %s657 = scalar_lea.vmem %s1, 58
  %v658 = vld [vmem:[%s657] sm:$0x3]
  %s659 = scalar_lea.vmem %s1, 60
  %v660 = vld [vmem:[%s659] sm:$0x3]
  %s661 = scalar_lea.vmem %s1, 62
  %v662 = vld [vmem:[%s661] sm:$0x3]
  %s663 = scalar_lea.vmem %s1, 64
  %v664 = vld [vmem:[%s663] sm:$0x3]
  %s665 = scalar_lea.vmem %s1, 66
  %v666 = vld [vmem:[%s665] sm:$0x3]
  %s667 = scalar_lea.vmem %s1, 68
  %v668 = vld [vmem:[%s667] sm:$0x3]
  %s669 = scalar_lea.vmem %s1, 70
  %v670 = vld [vmem:[%s669] sm:$0x3]
  %v671 = vmul.f32 %v585, %v654
  %v672 = vmul.f32 %v590, %v660
  %v673 = vadd.f32 %v671, %v672
  %v674 = vmul.f32 %v595, %v666
  %v675 = vadd.f32 %v673, %v674
  %v676 = vmul.f32 %v585, %v656
  %v677 = vmul.f32 %v590, %v662
  %v678 = vadd.f32 %v676, %v677
  %v679 = vmul.f32 %v595, %v668
  %v680 = vadd.f32 %v678, %v679
  %v681 = vmul.f32 %v585, %v658
  %v682 = vmul.f32 %v590, %v664
  %v683 = vadd.f32 %v681, %v682
  %v684 = vmul.f32 %v595, %v670
  %v685 = vadd.f32 %v683, %v684
  %v686 = vmul.f32 %v600, %v654
  %v687 = vmul.f32 %v605, %v660
  %v688 = vadd.f32 %v686, %v687
  %v689 = vmul.f32 %v610, %v666
  %v690 = vadd.f32 %v688, %v689
  %v691 = vmul.f32 %v600, %v656
  %v692 = vmul.f32 %v605, %v662
  %v693 = vadd.f32 %v691, %v692
  %v694 = vmul.f32 %v610, %v668
  %v695 = vadd.f32 %v693, %v694
  %v696 = vmul.f32 %v600, %v658
  %v697 = vmul.f32 %v605, %v664
  %v698 = vadd.f32 %v696, %v697
  %v699 = vmul.f32 %v610, %v670
  %v700 = vadd.f32 %v698, %v699
  %v701 = vmul.f32 %v615, %v654
  %v702 = vmul.f32 %v620, %v660
  %v703 = vadd.f32 %v701, %v702
  %v704 = vmul.f32 %v625, %v666
  %v705 = vadd.f32 %v703, %v704
  %v706 = vmul.f32 %v615, %v656
  %v707 = vmul.f32 %v620, %v662
  %v708 = vadd.f32 %v706, %v707
  %v709 = vmul.f32 %v625, %v668
  %v710 = vadd.f32 %v708, %v709
  %v711 = vmul.f32 %v615, %v658
  %v712 = vmul.f32 %v620, %v664
  %v713 = vadd.f32 %v711, %v712
  %v714 = vmul.f32 %v625, %v670
  %v715 = vadd.f32 %v713, %v714
  %716 = vrot.lane.b32.xlu0 %v483, 104
  %v717 = vpop.permute.xlu0 %716
  %v719 = vmul.f32 %v585, %v717
  %720 = vrot.lane.b32.xlu0 %v534, 104
  %v721 = vpop.permute.xlu0 %720
  %v723 = vmul.f32 %v590, %v721
  %v724 = vadd.f32 %v719, %v723
  %725 = vrot.lane.b32.xlu0 %v540, 104
  %v726 = vpop.permute.xlu0 %725
  %v728 = vmul.f32 %v595, %v726
  %v729 = vadd.f32 %v724, %v728
  %v730 = vadd.f32 %v729, %v640
  %v731 = vmul.f32 %v600, %v717
  %v732 = vmul.f32 %v605, %v721
  %v733 = vadd.f32 %v731, %v732
  %v734 = vmul.f32 %v610, %v726
  %v735 = vadd.f32 %v733, %v734
  %v736 = vadd.f32 %v735, %v646
  %v737 = vmul.f32 %v615, %v717
  %v738 = vmul.f32 %v620, %v721
  %v739 = vadd.f32 %v737, %v738
  %v740 = vmul.f32 %v625, %v726
  %v741 = vadd.f32 %v739, %v740
  %v742 = vadd.f32 %v741, %v652
  %s743 = scalar_lea.vmem %s1, 72
  %v744 = vld [vmem:[%s743] sm:$0x3]
  %s745 = scalar_lea.vmem %s1, 74
  %v746 = vld [vmem:[%s745] sm:$0x3]
  %s747 = scalar_lea.vmem %s1, 76
  %v748 = vld [vmem:[%s747] sm:$0x3]
  %s749 = scalar_lea.vmem %s1, 78
  %v750 = vld [vmem:[%s749] sm:$0x3]
  %s751 = scalar_lea.vmem %s1, 80
  %v752 = vld [vmem:[%s751] sm:$0x3]
  %s753 = scalar_lea.vmem %s1, 82
  %v754 = vld [vmem:[%s753] sm:$0x3]
  %s755 = scalar_lea.vmem %s1, 84
  %v756 = vld [vmem:[%s755] sm:$0x3]
  %s757 = scalar_lea.vmem %s1, 86
  %v758 = vld [vmem:[%s757] sm:$0x3]
  %s759 = scalar_lea.vmem %s1, 88
  %v760 = vld [vmem:[%s759] sm:$0x3]
  %v761 = vmul.f32 %v675, %v744
  %v762 = vmul.f32 %v680, %v750
  %v763 = vadd.f32 %v761, %v762
  %v764 = vmul.f32 %v685, %v756
  %v765 = vadd.f32 %v763, %v764
  %v766 = vmul.f32 %v675, %v746
  %v767 = vmul.f32 %v680, %v752
  %v768 = vadd.f32 %v766, %v767
  %v769 = vmul.f32 %v685, %v758
  %v770 = vadd.f32 %v768, %v769
  %v771 = vmul.f32 %v675, %v748
  %v772 = vmul.f32 %v680, %v754
  %v773 = vadd.f32 %v771, %v772
  %v774 = vmul.f32 %v685, %v760
  %v775 = vadd.f32 %v773, %v774
  %v776 = vmul.f32 %v690, %v744
  %v777 = vmul.f32 %v695, %v750
  %v778 = vadd.f32 %v776, %v777
  %v779 = vmul.f32 %v700, %v756
  %v780 = vadd.f32 %v778, %v779
  %v781 = vmul.f32 %v690, %v746
  %v782 = vmul.f32 %v695, %v752
  %v783 = vadd.f32 %v781, %v782
  %v784 = vmul.f32 %v700, %v758
  %v785 = vadd.f32 %v783, %v784
  %v786 = vmul.f32 %v690, %v748
  %v787 = vmul.f32 %v695, %v754
  %v788 = vadd.f32 %v786, %v787
  %v789 = vmul.f32 %v700, %v760
  %v790 = vadd.f32 %v788, %v789
  %v791 = vmul.f32 %v705, %v744
  %v792 = vmul.f32 %v710, %v750
  %v793 = vadd.f32 %v791, %v792
  %v794 = vmul.f32 %v715, %v756
  %v795 = vadd.f32 %v793, %v794
  %v796 = vmul.f32 %v705, %v746
  %v797 = vmul.f32 %v710, %v752
  %v798 = vadd.f32 %v796, %v797
  %v799 = vmul.f32 %v715, %v758
  %v800 = vadd.f32 %v798, %v799
  %v801 = vmul.f32 %v705, %v748
  %v802 = vmul.f32 %v710, %v754
  %v803 = vadd.f32 %v801, %v802
  %v804 = vmul.f32 %v715, %v760
  %v805 = vadd.f32 %v803, %v804
  %806 = vrot.lane.b32.xlu0 %v483, 96
  %v807 = vpop.permute.xlu0 %806
  %v809 = vmul.f32 %v675, %v807
  %810 = vrot.lane.b32.xlu0 %v534, 96
  %v811 = vpop.permute.xlu0 %810
  %v813 = vmul.f32 %v680, %v811
  %v814 = vadd.f32 %v809, %v813
  %815 = vrot.lane.b32.xlu0 %v540, 96
  %v816 = vpop.permute.xlu0 %815
  %v818 = vmul.f32 %v685, %v816
  %v819 = vadd.f32 %v814, %v818
  %v820 = vadd.f32 %v819, %v730
  %v821 = vmul.f32 %v690, %v807
  %v822 = vmul.f32 %v695, %v811
  %v823 = vadd.f32 %v821, %v822
  %v824 = vmul.f32 %v700, %v816
  %v825 = vadd.f32 %v823, %v824
  %v826 = vadd.f32 %v825, %v736
  %v827 = vmul.f32 %v705, %v807
  %v828 = vmul.f32 %v710, %v811
  %v829 = vadd.f32 %v827, %v828
  %v830 = vmul.f32 %v715, %v816
  %v831 = vadd.f32 %v829, %v830
  %v832 = vadd.f32 %v831, %v742
  %v833 = vmul.f32 %v444, %v441
  %v834 = vmul.f32 %v446, %v552
  %v835 = vadd.f32 %v833, %v834
  %v836 = vmul.f32 %v448, %v560
  %v837 = vadd.f32 %v835, %v836
  %v838 = vsub.f32 %v441, %v837
  %v839 = vmul.f32 %v450, %v441
  %v840 = vmul.f32 %v452, %v552
  %v841 = vadd.f32 %v839, %v840
  %v842 = vmul.f32 %v454, %v560
  %v843 = vadd.f32 %v841, %v842
  %v845 = vrot.slane %v843, 6
  %v847 = vsub.f32 %v441, %v845
  %v848 = vmul.f32 %v456, %v441
  %v849 = vmul.f32 %v458, %v552
  %v850 = vadd.f32 %v848, %v849
  %v851 = vmul.f32 %v460, %v560
  %v852 = vadd.f32 %v850, %v851
  %v854 = vrot.slane %v852, 4
  %v856 = vsub.f32 %v441, %v854
  %v858 = vrot.slane %v450, 6
  %v861 = vrot.slane %v456, 4
  %v864 = vrot.slane %v446, 2
  %v867 = vrot.slane %v458, 6
  %v870 = vrot.slane %v448, 4
  %v873 = vrot.slane %v454, 2
  %v876 = vrot.slane %v838, 6
  %v879 = vrot.slane %v847, 6
  %v882 = vrot.slane %v856, 6
  %v884 = vsel %vm336, %v444, %v858
  %v885 = vsel %vm339, %v884, %v861
  %vm886 = vcmask 1045504
  %v887 = vsel %vm886, %v885, %v864
  %v888 = vsel %vm336, %v452, %v867
  %v889 = vsel %vm339, %v888, %v870
  %v890 = vsel %vm886, %v889, %v873
  %v891 = vsel %vm336, %v460, %v876
  %v892 = vsel %vm339, %v891, %v879
  %v893 = vsel %vm886, %v892, %v882
  %v894 = vld [vmem:[%s5] sm:$0xff]
  %v895 = vld [vmem:[%s5 + $0x8] sm:$0xff]
  %896 = vrot.lane.b32.xlu0 %v441, 120
  %v897 = vpop.permute.xlu0 %896
  %v899 = vmul.f32 %v488, %v897
  %900 = vrot.lane.b32.xlu0 %v552, 120
  %v901 = vpop.permute.xlu0 %900
  %v903 = vmul.f32 %v493, %v901
  %v904 = vadd.f32 %v899, %v903
  %905 = vrot.lane.b32.xlu0 %v560, 120
  %v906 = vpop.permute.xlu0 %905
  %v908 = vmul.f32 %v498, %v906
  %v909 = vadd.f32 %v904, %v908
  %v910 = vsub.f32 %v546, %v909
  %v911 = vmul.f32 %v503, %v897
  %v912 = vmul.f32 %v508, %v901
  %v913 = vadd.f32 %v911, %v912
  %v914 = vmul.f32 %v513, %v906
  %v915 = vadd.f32 %v913, %v914
  %v916 = vsub.f32 %v554, %v915
  %v917 = vmul.f32 %v518, %v897
  %v918 = vmul.f32 %v523, %v901
  %v919 = vadd.f32 %v917, %v918
  %v920 = vmul.f32 %v528, %v906
  %v921 = vadd.f32 %v919, %v920
  %v922 = vsub.f32 %v562, %v921
  %v924 = vrot.slane %v503, 6
  %v927 = vrot.slane %v518, 4
  %v930 = vrot.slane %v493, 2
  %v933 = vrot.slane %v523, 6
  %v936 = vrot.slane %v498, 4
  %v939 = vrot.slane %v513, 2
  %v942 = vrot.slane %v910, 6
  %v945 = vrot.slane %v916, 4
  %v948 = vrot.slane %v922, 2
  %v950 = vsel %vm336, %v488, %v924
  %v951 = vsel %vm339, %v950, %v927
  %v952 = vsel %vm886, %v951, %v930
  %v953 = vsel %vm336, %v508, %v933
  %v954 = vsel %vm339, %v953, %v936
  %v955 = vsel %vm886, %v954, %v939
  %v956 = vsel %vm336, %v528, %v942
  %v957 = vsel %vm339, %v956, %v945
  %v958 = vsel %vm886, %v957, %v948
  %v959 = vld [vmem:[%s5 + $0x10] sm:$0xff]
  %v960 = vld [vmem:[%s5 + $0x18] sm:$0xff]
  %vm961 = vcmask 64512
  %v963 = vsel %vm961, %v952, 0
  %v966 = vsel %vm961, %v955, 0
  %v969 = vsel %vm961, %v958, 0
  %971 = vmatprep.subr.mxu0 %v960
  %972 = vmatpush1.msra.mxu0 %v959
  %973 = vmatprep.subr.mxu0 0.0
  %974 = vmatpush1.msra.mxu0 0.0
  %975 = vmatprep.subr.mxu0 0.0
  %976 = vmatpush1.msra.mxu0 0.0
  %977 = vmatprep.subr.mxu0 0.0
  %978 = vmatpush1.msra.mxu0 0.0
  %979 = vmatprep.subr.mxu0 0.0
  %980 = vmatpush1.msra.mxu0 0.0
  %981 = vmatprep.subr.mxu0 0.0
  %982 = vmatpush1.msra.mxu0 0.0
  %983 = vmatprep.subr.mxu0 0.0
  %984 = vmatpush1.msra.mxu0 0.0
  %985 = vmatprep.subr.mxu0 0.0
  %986 = vmatpush1.msra.mxu0 0.0
  %987 = vmatprep.subr.mxu0 0.0
  %988 = vmatpush1.msra.mxu0 0.0
  %989 = vmatprep.subr.mxu0 0.0
  %990 = vmatpush1.msra.mxu0 0.0
  %991 = vmatprep.subr.mxu0 0.0
  %992 = vmatpush1.msra.mxu0 0.0
  %993 = vmatprep.subr.mxu0 0.0
  %994 = vmatpush1.msra.mxu0 0.0
  %995 = vmatprep.subr.mxu0 0.0
  %996 = vmatpush1.msra.mxu0 0.0
  %997 = vmatprep.subr.mxu0 0.0
  %998 = vmatpush1.msra.mxu0 0.0
  %999 = vmatprep.subr.mxu0 0.0
  %1000 = vmatpush1.msra.mxu0 0.0
  %1001 = vmatprep.subr.mxu0 0.0
  %1002 = vmatpush1.msra.mxu0 0.0
  %1003 = vmatprep.subr.mxu0 0.0
  %1004 = vmatpush1.msra.mxu0 0.0
  %1005 = vmatprep.subr.mxu0 0.0
  %1006 = vmatpush1.msra.mxu0 0.0
  %1007 = vmatprep.subr.mxu0 0.0
  %1008 = vmatpush1.msra.mxu0 0.0
  %1009 = vmatprep.subr.mxu0 0.0
  %1010 = vmatpush1.msra.mxu0 0.0
  %1011 = vmatprep.subr.mxu0 0.0
  %1012 = vmatpush1.msra.mxu0 0.0
  %1013 = vmatprep.subr.mxu0 0.0
  %1014 = vmatpush1.msra.mxu0 0.0
  %1015 = vmatprep.subr.mxu0 0.0
  %1016 = vmatpush1.msra.mxu0 0.0
  %1017 = vmatprep.subr.mxu0 0.0
  %1018 = vmatpush1.msra.mxu0 0.0
  %1019 = vmatprep.subr.mxu0 0.0
  %1020 = vmatpush1.msra.mxu0 0.0
  %1021 = vmatprep.subr.mxu0 0.0
  %1022 = vmatpush1.msra.mxu0 0.0
  %1023 = vmatprep.subr.mxu0 0.0
  %1024 = vmatpush1.msra.mxu0 0.0
  %1025 = vmatprep.subr.mxu0 0.0
  %1026 = vmatpush1.msra.mxu0 0.0
  %1027 = vmatprep.subr.mxu0 0.0
  %1028 = vmatpush1.msra.mxu0 0.0
  %1029 = vmatprep.subr.mxu0 0.0
  %1030 = vmatpush1.msra.mxu0 0.0
  %1031 = vmatprep.subr.mxu0 0.0
  %1032 = vmatpush1.msra.mxu0 0.0
  %1033 = vmatprep.subr.mxu0 0.0
  %1034 = vmatpush1.msra.mxu0 0.0
  %1035 = vmatprep.mubr.f32.mxu0 0.0
  %1036 = vmatmul.mubr.f32.gmra.mrb[0].mxu0 %v963
  %v1037 = vpop.f32.mrb[0].mxu0
  %v1038 = vadd.f32 0.0, %v1037
  %v1039 = vpop.f32.mrb[0].mxu0
  %v1040 = vadd.f32 0.0, %v1039
  %1041 = vmatprep.mubr.f32.mxu0 0.0
  %1042 = vmatmul.mubr.f32.gmra.mrb[0].mxu0 %v966
  %v1043 = vpop.f32.mrb[0].mxu0
  %v1044 = vadd.f32 0.0, %v1043
  %v1045 = vpop.f32.mrb[0].mxu0
  %v1046 = vadd.f32 0.0, %v1045
  %1047 = vmatprep.mubr.f32.mxu0 0.0
  %1048 = vmatmul.mubr.f32.gmra.mrb[0].mxu0 %v969
  %v1049 = vpop.f32.mrb[0].mxu0
  %v1050 = vadd.f32 0.0, %v1049
  %v1051 = vpop.f32.mrb[0].mxu0
  %v1052 = vadd.f32 0.0, %v1051
  %1053 = vdwg.mxu0
  %v1055 = vsel %vm961, %v887, 0
  %v1058 = vsel %vm961, %v890, 0
  %v1061 = vsel %vm961, %v893, 0
  %1063 = vmatprep.subr.mxu0 %v895
  %1064 = vmatpush1.msra.mxu0 %v894
  %1065 = vmatprep.subr.mxu0 0.0
  %1066 = vmatpush1.msra.mxu0 0.0
  %1067 = vmatprep.subr.mxu0 0.0
  %1068 = vmatpush1.msra.mxu0 0.0
  %1069 = vmatprep.subr.mxu0 0.0
  %1070 = vmatpush1.msra.mxu0 0.0
  %1071 = vmatprep.subr.mxu0 0.0
  %1072 = vmatpush1.msra.mxu0 0.0
  %1073 = vmatprep.subr.mxu0 0.0
  %1074 = vmatpush1.msra.mxu0 0.0
  %1075 = vmatprep.subr.mxu0 0.0
  %1076 = vmatpush1.msra.mxu0 0.0
  %1077 = vmatprep.subr.mxu0 0.0
  %1078 = vmatpush1.msra.mxu0 0.0
  %1079 = vmatprep.subr.mxu0 0.0
  %1080 = vmatpush1.msra.mxu0 0.0
  %1081 = vmatprep.subr.mxu0 0.0
  %1082 = vmatpush1.msra.mxu0 0.0
  %1083 = vmatprep.subr.mxu0 0.0
  %1084 = vmatpush1.msra.mxu0 0.0
  %1085 = vmatprep.subr.mxu0 0.0
  %1086 = vmatpush1.msra.mxu0 0.0
  %1087 = vmatprep.subr.mxu0 0.0
  %1088 = vmatpush1.msra.mxu0 0.0
  %1089 = vmatprep.subr.mxu0 0.0
  %1090 = vmatpush1.msra.mxu0 0.0
  %1091 = vmatprep.subr.mxu0 0.0
  %1092 = vmatpush1.msra.mxu0 0.0
  %1093 = vmatprep.subr.mxu0 0.0
  %1094 = vmatpush1.msra.mxu0 0.0
  %1095 = vmatprep.subr.mxu0 0.0
  %1096 = vmatpush1.msra.mxu0 0.0
  %1097 = vmatprep.subr.mxu0 0.0
  %1098 = vmatpush1.msra.mxu0 0.0
  %1099 = vmatprep.subr.mxu0 0.0
  %1100 = vmatpush1.msra.mxu0 0.0
  %1101 = vmatprep.subr.mxu0 0.0
  %1102 = vmatpush1.msra.mxu0 0.0
  %1103 = vmatprep.subr.mxu0 0.0
  %1104 = vmatpush1.msra.mxu0 0.0
  %1105 = vmatprep.subr.mxu0 0.0
  %1106 = vmatpush1.msra.mxu0 0.0
  %1107 = vmatprep.subr.mxu0 0.0
  %1108 = vmatpush1.msra.mxu0 0.0
  %1109 = vmatprep.subr.mxu0 0.0
  %1110 = vmatpush1.msra.mxu0 0.0
  %1111 = vmatprep.subr.mxu0 0.0
  %1112 = vmatpush1.msra.mxu0 0.0
  %1113 = vmatprep.subr.mxu0 0.0
  %1114 = vmatpush1.msra.mxu0 0.0
  %1115 = vmatprep.subr.mxu0 0.0
  %1116 = vmatpush1.msra.mxu0 0.0
  %1117 = vmatprep.subr.mxu0 0.0
  %1118 = vmatpush1.msra.mxu0 0.0
  %1119 = vmatprep.subr.mxu0 0.0
  %1120 = vmatpush1.msra.mxu0 0.0
  %1121 = vmatprep.subr.mxu0 0.0
  %1122 = vmatpush1.msra.mxu0 0.0
  %1123 = vmatprep.subr.mxu0 0.0
  %1124 = vmatpush1.msra.mxu0 0.0
  %1125 = vmatprep.subr.mxu0 0.0
  %1126 = vmatpush1.msra.mxu0 0.0
  %1127 = vmatprep.mubr.f32.mxu0 0.0
  %1128 = vmatmul.mubr.f32.gmra.mrb[0].mxu0 %v1055
  %v1129 = vpop.f32.mrb[0].mxu0
  %v1130 = vadd.f32 %v1038, %v1129
  %v1131 = vpop.f32.mrb[0].mxu0
  %v1132 = vadd.f32 %v1040, %v1131
  %1133 = vmatprep.mubr.f32.mxu0 0.0
  %1134 = vmatmul.mubr.f32.gmra.mrb[0].mxu0 %v1058
  %v1135 = vpop.f32.mrb[0].mxu0
  %v1136 = vadd.f32 %v1044, %v1135
  %v1137 = vpop.f32.mrb[0].mxu0
  %v1138 = vadd.f32 %v1046, %v1137
  %1139 = vmatprep.mubr.f32.mxu0 0.0
  %1140 = vmatmul.mubr.f32.gmra.mrb[0].mxu0 %v1061
  %v1141 = vpop.f32.mrb[0].mxu0
  %v1142 = vadd.f32 %v1050, %v1141
  %v1143 = vpop.f32.mrb[0].mxu0
  %v1144 = vadd.f32 %v1052, %v1143
  %1145 = vdwg.mxu0
  %1146 = vrot.lane.b32.xlu0 %v441, 112
  %v1147 = vpop.permute.xlu0 %1146
  %v1149 = vmul.f32 %v585, %v1147
  %1150 = vrot.lane.b32.xlu0 %v552, 112
  %v1151 = vpop.permute.xlu0 %1150
  %v1153 = vmul.f32 %v590, %v1151
  %v1154 = vadd.f32 %v1149, %v1153
  %1155 = vrot.lane.b32.xlu0 %v560, 112
  %v1156 = vpop.permute.xlu0 %1155
  %v1158 = vmul.f32 %v595, %v1156
  %v1159 = vadd.f32 %v1154, %v1158
  %v1160 = vsub.f32 %v640, %v1159
  %v1161 = vmul.f32 %v600, %v1147
  %v1162 = vmul.f32 %v605, %v1151
  %v1163 = vadd.f32 %v1161, %v1162
  %v1164 = vmul.f32 %v610, %v1156
  %v1165 = vadd.f32 %v1163, %v1164
  %v1166 = vsub.f32 %v646, %v1165
  %v1167 = vmul.f32 %v615, %v1147
  %v1168 = vmul.f32 %v620, %v1151
  %v1169 = vadd.f32 %v1167, %v1168
  %v1170 = vmul.f32 %v625, %v1156
  %v1171 = vadd.f32 %v1169, %v1170
  %v1172 = vsub.f32 %v652, %v1171
  %v1174 = vrot.slane %v600, 6
  %v1177 = vrot.slane %v615, 4
  %v1180 = vrot.slane %v590, 2
  %v1183 = vrot.slane %v620, 6
  %v1186 = vrot.slane %v595, 4
  %v1189 = vrot.slane %v610, 2
  %v1192 = vrot.slane %v1160, 6
  %v1195 = vrot.slane %v1166, 4
  %v1198 = vrot.slane %v1172, 2
  %v1200 = vsel %vm336, %v585, %v1174
  %v1201 = vsel %vm339, %v1200, %v1177
  %v1202 = vsel %vm886, %v1201, %v1180
  %v1203 = vsel %vm336, %v605, %v1183
  %v1204 = vsel %vm339, %v1203, %v1186
  %v1205 = vsel %vm886, %v1204, %v1189
  %v1206 = vsel %vm336, %v625, %v1192
  %v1207 = vsel %vm339, %v1206, %v1195
  %v1208 = vsel %vm886, %v1207, %v1198
  %v1209 = vld [vmem:[%s5 + $0x20] sm:$0xff]
  %v1210 = vld [vmem:[%s5 + $0x28] sm:$0xff]
  %v1212 = vsel %vm961, %v1202, 0
  %v1215 = vsel %vm961, %v1205, 0
  %v1218 = vsel %vm961, %v1208, 0
  %1220 = vmatprep.subr.mxu0 %v1210
  %1221 = vmatpush1.msra.mxu0 %v1209
  %1222 = vmatprep.subr.mxu0 0.0
  %1223 = vmatpush1.msra.mxu0 0.0
  %1224 = vmatprep.subr.mxu0 0.0
  %1225 = vmatpush1.msra.mxu0 0.0
  %1226 = vmatprep.subr.mxu0 0.0
  %1227 = vmatpush1.msra.mxu0 0.0
  %1228 = vmatprep.subr.mxu0 0.0
  %1229 = vmatpush1.msra.mxu0 0.0
  %1230 = vmatprep.subr.mxu0 0.0
  %1231 = vmatpush1.msra.mxu0 0.0
  %1232 = vmatprep.subr.mxu0 0.0
  %1233 = vmatpush1.msra.mxu0 0.0
  %1234 = vmatprep.subr.mxu0 0.0
  %1235 = vmatpush1.msra.mxu0 0.0
  %1236 = vmatprep.subr.mxu0 0.0
  %1237 = vmatpush1.msra.mxu0 0.0
  %1238 = vmatprep.subr.mxu0 0.0
  %1239 = vmatpush1.msra.mxu0 0.0
  %1240 = vmatprep.subr.mxu0 0.0
  %1241 = vmatpush1.msra.mxu0 0.0
  %1242 = vmatprep.subr.mxu0 0.0
  %1243 = vmatpush1.msra.mxu0 0.0
  %1244 = vmatprep.subr.mxu0 0.0
  %1245 = vmatpush1.msra.mxu0 0.0
  %1246 = vmatprep.subr.mxu0 0.0
  %1247 = vmatpush1.msra.mxu0 0.0
  %1248 = vmatprep.subr.mxu0 0.0
  %1249 = vmatpush1.msra.mxu0 0.0
  %1250 = vmatprep.subr.mxu0 0.0
  %1251 = vmatpush1.msra.mxu0 0.0
  %1252 = vmatprep.subr.mxu0 0.0
  %1253 = vmatpush1.msra.mxu0 0.0
  %1254 = vmatprep.subr.mxu0 0.0
  %1255 = vmatpush1.msra.mxu0 0.0
  %1256 = vmatprep.subr.mxu0 0.0
  %1257 = vmatpush1.msra.mxu0 0.0
  %1258 = vmatprep.subr.mxu0 0.0
  %1259 = vmatpush1.msra.mxu0 0.0
  %1260 = vmatprep.subr.mxu0 0.0
  %1261 = vmatpush1.msra.mxu0 0.0
  %1262 = vmatprep.subr.mxu0 0.0
  %1263 = vmatpush1.msra.mxu0 0.0
  %1264 = vmatprep.subr.mxu0 0.0
  %1265 = vmatpush1.msra.mxu0 0.0
  %1266 = vmatprep.subr.mxu0 0.0
  %1267 = vmatpush1.msra.mxu0 0.0
  %1268 = vmatprep.subr.mxu0 0.0
  %1269 = vmatpush1.msra.mxu0 0.0
  %1270 = vmatprep.subr.mxu0 0.0
  %1271 = vmatpush1.msra.mxu0 0.0
  %1272 = vmatprep.subr.mxu0 0.0
  %1273 = vmatpush1.msra.mxu0 0.0
  %1274 = vmatprep.subr.mxu0 0.0
  %1275 = vmatpush1.msra.mxu0 0.0
  %1276 = vmatprep.subr.mxu0 0.0
  %1277 = vmatpush1.msra.mxu0 0.0
  %1278 = vmatprep.subr.mxu0 0.0
  %1279 = vmatpush1.msra.mxu0 0.0
  %1280 = vmatprep.subr.mxu0 0.0
  %1281 = vmatpush1.msra.mxu0 0.0
  %1282 = vmatprep.subr.mxu0 0.0
  %1283 = vmatpush1.msra.mxu0 0.0
  %1284 = vmatprep.mubr.f32.mxu0 0.0
  %1285 = vmatmul.mubr.f32.gmra.mrb[0].mxu0 %v1212
  %v1286 = vpop.f32.mrb[0].mxu0
  %v1287 = vadd.f32 0.0, %v1286
  %v1288 = vpop.f32.mrb[0].mxu0
  %v1289 = vadd.f32 0.0, %v1288
  %1290 = vmatprep.mubr.f32.mxu0 0.0
  %1291 = vmatmul.mubr.f32.gmra.mrb[0].mxu0 %v1215
  %v1292 = vpop.f32.mrb[0].mxu0
  %v1293 = vadd.f32 0.0, %v1292
  %v1294 = vpop.f32.mrb[0].mxu0
  %v1295 = vadd.f32 0.0, %v1294
  %1296 = vmatprep.mubr.f32.mxu0 0.0
  %1297 = vmatmul.mubr.f32.gmra.mrb[0].mxu0 %v1218
  %v1298 = vpop.f32.mrb[0].mxu0
  %v1299 = vadd.f32 0.0, %v1298
  %v1300 = vpop.f32.mrb[0].mxu0
  %v1301 = vadd.f32 0.0, %v1300
  %1302 = vdwg.mxu0
  %v1303 = vadd.f32 %v1130, %v1287
  %v1304 = vadd.f32 %v1132, %v1289
  %v1305 = vadd.f32 %v1136, %v1293
  %v1306 = vadd.f32 %v1138, %v1295
  %v1307 = vadd.f32 %v1142, %v1299
  %v1308 = vadd.f32 %v1144, %v1301
  %1309 = vrot.lane.b32.xlu0 %v441, 104
  %v1310 = vpop.permute.xlu0 %1309
  %v1312 = vmul.f32 %v675, %v1310
  %1313 = vrot.lane.b32.xlu0 %v552, 104
  %v1314 = vpop.permute.xlu0 %1313
  %v1316 = vmul.f32 %v680, %v1314
  %v1317 = vadd.f32 %v1312, %v1316
  %1318 = vrot.lane.b32.xlu0 %v560, 104
  %v1319 = vpop.permute.xlu0 %1318
  %v1321 = vmul.f32 %v685, %v1319
  %v1322 = vadd.f32 %v1317, %v1321
  %v1323 = vsub.f32 %v730, %v1322
  %v1324 = vmul.f32 %v690, %v1310
  %v1325 = vmul.f32 %v695, %v1314
  %v1326 = vadd.f32 %v1324, %v1325
  %v1327 = vmul.f32 %v700, %v1319
  %v1328 = vadd.f32 %v1326, %v1327
  %v1329 = vsub.f32 %v736, %v1328
  %v1330 = vmul.f32 %v705, %v1310
  %v1331 = vmul.f32 %v710, %v1314
  %v1332 = vadd.f32 %v1330, %v1331
  %v1333 = vmul.f32 %v715, %v1319
  %v1334 = vadd.f32 %v1332, %v1333
  %v1335 = vsub.f32 %v742, %v1334
  %v1337 = vrot.slane %v690, 6
  %v1340 = vrot.slane %v705, 4
  %v1343 = vrot.slane %v680, 2
  %v1346 = vrot.slane %v710, 6
  %v1349 = vrot.slane %v685, 4
  %v1352 = vrot.slane %v700, 2
  %v1355 = vrot.slane %v1323, 6
  %v1358 = vrot.slane %v1329, 4
  %v1361 = vrot.slane %v1335, 2
  %v1363 = vsel %vm336, %v675, %v1337
  %v1364 = vsel %vm339, %v1363, %v1340
  %v1365 = vsel %vm886, %v1364, %v1343
  %v1366 = vsel %vm336, %v695, %v1346
  %v1367 = vsel %vm339, %v1366, %v1349
  %v1368 = vsel %vm886, %v1367, %v1352
  %v1369 = vsel %vm336, %v715, %v1355
  %v1370 = vsel %vm339, %v1369, %v1358
  %v1371 = vsel %vm886, %v1370, %v1361
  %v1372 = vld [vmem:[%s5 + $0x30] sm:$0xff]
  %v1373 = vld [vmem:[%s5 + $0x38] sm:$0xff]
  %v1375 = vsel %vm961, %v1365, 0
  %v1378 = vsel %vm961, %v1368, 0
  %v1381 = vsel %vm961, %v1371, 0
  %1383 = vmatprep.subr.mxu0 %v1373
  %1384 = vmatpush1.msra.mxu0 %v1372
  %1385 = vmatprep.subr.mxu0 0.0
  %1386 = vmatpush1.msra.mxu0 0.0
  %1387 = vmatprep.subr.mxu0 0.0
  %1388 = vmatpush1.msra.mxu0 0.0
  %1389 = vmatprep.subr.mxu0 0.0
  %1390 = vmatpush1.msra.mxu0 0.0
  %1391 = vmatprep.subr.mxu0 0.0
  %1392 = vmatpush1.msra.mxu0 0.0
  %1393 = vmatprep.subr.mxu0 0.0
  %1394 = vmatpush1.msra.mxu0 0.0
  %1395 = vmatprep.subr.mxu0 0.0
  %1396 = vmatpush1.msra.mxu0 0.0
  %1397 = vmatprep.subr.mxu0 0.0
  %1398 = vmatpush1.msra.mxu0 0.0
  %1399 = vmatprep.subr.mxu0 0.0
  %1400 = vmatpush1.msra.mxu0 0.0
  %1401 = vmatprep.subr.mxu0 0.0
  %1402 = vmatpush1.msra.mxu0 0.0
  %1403 = vmatprep.subr.mxu0 0.0
  %1404 = vmatpush1.msra.mxu0 0.0
  %1405 = vmatprep.subr.mxu0 0.0
  %1406 = vmatpush1.msra.mxu0 0.0
  %1407 = vmatprep.subr.mxu0 0.0
  %1408 = vmatpush1.msra.mxu0 0.0
  %1409 = vmatprep.subr.mxu0 0.0
  %1410 = vmatpush1.msra.mxu0 0.0
  %1411 = vmatprep.subr.mxu0 0.0
  %1412 = vmatpush1.msra.mxu0 0.0
  %1413 = vmatprep.subr.mxu0 0.0
  %1414 = vmatpush1.msra.mxu0 0.0
  %1415 = vmatprep.subr.mxu0 0.0
  %1416 = vmatpush1.msra.mxu0 0.0
  %1417 = vmatprep.subr.mxu0 0.0
  %1418 = vmatpush1.msra.mxu0 0.0
  %1419 = vmatprep.subr.mxu0 0.0
  %1420 = vmatpush1.msra.mxu0 0.0
  %1421 = vmatprep.subr.mxu0 0.0
  %1422 = vmatpush1.msra.mxu0 0.0
  %1423 = vmatprep.subr.mxu0 0.0
  %1424 = vmatpush1.msra.mxu0 0.0
  %1425 = vmatprep.subr.mxu0 0.0
  %1426 = vmatpush1.msra.mxu0 0.0
  %1427 = vmatprep.subr.mxu0 0.0
  %1428 = vmatpush1.msra.mxu0 0.0
  %1429 = vmatprep.subr.mxu0 0.0
  %1430 = vmatpush1.msra.mxu0 0.0
  %1431 = vmatprep.subr.mxu0 0.0
  %1432 = vmatpush1.msra.mxu0 0.0
  %1433 = vmatprep.subr.mxu0 0.0
  %1434 = vmatpush1.msra.mxu0 0.0
  %1435 = vmatprep.subr.mxu0 0.0
  %1436 = vmatpush1.msra.mxu0 0.0
  %1437 = vmatprep.subr.mxu0 0.0
  %1438 = vmatpush1.msra.mxu0 0.0
  %1439 = vmatprep.subr.mxu0 0.0
  %1440 = vmatpush1.msra.mxu0 0.0
  %1441 = vmatprep.subr.mxu0 0.0
  %1442 = vmatpush1.msra.mxu0 0.0
  %1443 = vmatprep.subr.mxu0 0.0
  %1444 = vmatpush1.msra.mxu0 0.0
  %1445 = vmatprep.subr.mxu0 0.0
  %1446 = vmatpush1.msra.mxu0 0.0
  %1447 = vmatprep.mubr.f32.mxu0 0.0
  %1448 = vmatmul.mubr.f32.gmra.mrb[0].mxu0 %v1375
  %v1449 = vpop.f32.mrb[0].mxu0
  %v1450 = vadd.f32 0.0, %v1449
  %v1451 = vpop.f32.mrb[0].mxu0
  %v1452 = vadd.f32 0.0, %v1451
  %1453 = vmatprep.mubr.f32.mxu0 0.0
  %1454 = vmatmul.mubr.f32.gmra.mrb[0].mxu0 %v1378
  %v1455 = vpop.f32.mrb[0].mxu0
  %v1456 = vadd.f32 0.0, %v1455
  %v1457 = vpop.f32.mrb[0].mxu0
  %v1458 = vadd.f32 0.0, %v1457
  %1459 = vmatprep.mubr.f32.mxu0 0.0
  %1460 = vmatmul.mubr.f32.gmra.mrb[0].mxu0 %v1381
  %v1461 = vpop.f32.mrb[0].mxu0
  %v1462 = vadd.f32 0.0, %v1461
  %v1463 = vpop.f32.mrb[0].mxu0
  %v1464 = vadd.f32 0.0, %v1463
  %1465 = vdwg.mxu0
  %v1466 = vadd.f32 %v1303, %v1450
  %v1467 = vadd.f32 %v1304, %v1452
  %v1468 = vadd.f32 %v1305, %v1456
  %v1469 = vadd.f32 %v1306, %v1458
  %v1470 = vadd.f32 %v1307, %v1462
  %v1471 = vadd.f32 %v1308, %v1464
  %1472 = vrot.lane.b32.xlu0 %v441, 96
  %v1473 = vpop.permute.xlu0 %1472
  %v1475 = vmul.f32 %v765, %v1473
  %1476 = vrot.lane.b32.xlu0 %v552, 96
  %v1477 = vpop.permute.xlu0 %1476
  %v1479 = vmul.f32 %v770, %v1477
  %v1480 = vadd.f32 %v1475, %v1479
  %1481 = vrot.lane.b32.xlu0 %v560, 96
  %v1482 = vpop.permute.xlu0 %1481
  %v1484 = vmul.f32 %v775, %v1482
  %v1485 = vadd.f32 %v1480, %v1484
  %v1486 = vsub.f32 %v820, %v1485
  %v1487 = vmul.f32 %v780, %v1473
  %v1488 = vmul.f32 %v785, %v1477
  %v1489 = vadd.f32 %v1487, %v1488
  %v1490 = vmul.f32 %v790, %v1482
  %v1491 = vadd.f32 %v1489, %v1490
  %v1492 = vsub.f32 %v826, %v1491
  %v1493 = vmul.f32 %v795, %v1473
  %v1494 = vmul.f32 %v800, %v1477
  %v1495 = vadd.f32 %v1493, %v1494
  %v1496 = vmul.f32 %v805, %v1482
  %v1497 = vadd.f32 %v1495, %v1496
  %v1498 = vsub.f32 %v832, %v1497
  %v1500 = vrot.slane %v780, 6
  %v1503 = vrot.slane %v795, 4
  %v1506 = vrot.slane %v770, 2
  %v1509 = vrot.slane %v800, 6
  %v1512 = vrot.slane %v775, 4
  %v1515 = vrot.slane %v790, 2
  %v1518 = vrot.slane %v1486, 6
  %v1521 = vrot.slane %v1492, 4
  %v1524 = vrot.slane %v1498, 2
  %v1526 = vsel %vm336, %v765, %v1500
  %v1527 = vsel %vm339, %v1526, %v1503
  %v1528 = vsel %vm886, %v1527, %v1506
  %v1529 = vsel %vm336, %v785, %v1509
  %v1530 = vsel %vm339, %v1529, %v1512
  %v1531 = vsel %vm886, %v1530, %v1515
  %v1532 = vsel %vm336, %v805, %v1518
  %v1533 = vsel %vm339, %v1532, %v1521
  %v1534 = vsel %vm886, %v1533, %v1524
  %v1535 = vld [vmem:[%s5 + $0x40] sm:$0xff]
  %v1536 = vld [vmem:[%s5 + $0x48] sm:$0xff]
  %v1538 = vsel %vm961, %v1528, 0
  %v1541 = vsel %vm961, %v1531, 0
  %v1544 = vsel %vm961, %v1534, 0
  %1546 = vmatprep.subr.mxu0 %v1536
  %1547 = vmatpush1.msra.mxu0 %v1535
  %1548 = vmatprep.subr.mxu0 0.0
  %1549 = vmatpush1.msra.mxu0 0.0
  %1550 = vmatprep.subr.mxu0 0.0
  %1551 = vmatpush1.msra.mxu0 0.0
  %1552 = vmatprep.subr.mxu0 0.0
  %1553 = vmatpush1.msra.mxu0 0.0
  %1554 = vmatprep.subr.mxu0 0.0
  %1555 = vmatpush1.msra.mxu0 0.0
  %1556 = vmatprep.subr.mxu0 0.0
  %1557 = vmatpush1.msra.mxu0 0.0
  %1558 = vmatprep.subr.mxu0 0.0
  %1559 = vmatpush1.msra.mxu0 0.0
  %1560 = vmatprep.subr.mxu0 0.0
  %1561 = vmatpush1.msra.mxu0 0.0
  %1562 = vmatprep.subr.mxu0 0.0
  %1563 = vmatpush1.msra.mxu0 0.0
  %1564 = vmatprep.subr.mxu0 0.0
  %1565 = vmatpush1.msra.mxu0 0.0
  %1566 = vmatprep.subr.mxu0 0.0
  %1567 = vmatpush1.msra.mxu0 0.0
  %1568 = vmatprep.subr.mxu0 0.0
  %1569 = vmatpush1.msra.mxu0 0.0
  %1570 = vmatprep.subr.mxu0 0.0
  %1571 = vmatpush1.msra.mxu0 0.0
  %1572 = vmatprep.subr.mxu0 0.0
  %1573 = vmatpush1.msra.mxu0 0.0
  %1574 = vmatprep.subr.mxu0 0.0
  %1575 = vmatpush1.msra.mxu0 0.0
  %1576 = vmatprep.subr.mxu0 0.0
  %1577 = vmatpush1.msra.mxu0 0.0
  %1578 = vmatprep.subr.mxu0 0.0
  %1579 = vmatpush1.msra.mxu0 0.0
  %1580 = vmatprep.subr.mxu0 0.0
  %1581 = vmatpush1.msra.mxu0 0.0
  %1582 = vmatprep.subr.mxu0 0.0
  %1583 = vmatpush1.msra.mxu0 0.0
  %1584 = vmatprep.subr.mxu0 0.0
  %1585 = vmatpush1.msra.mxu0 0.0
  %1586 = vmatprep.subr.mxu0 0.0
  %1587 = vmatpush1.msra.mxu0 0.0
  %1588 = vmatprep.subr.mxu0 0.0
  %1589 = vmatpush1.msra.mxu0 0.0
  %1590 = vmatprep.subr.mxu0 0.0
  %1591 = vmatpush1.msra.mxu0 0.0
  %1592 = vmatprep.subr.mxu0 0.0
  %1593 = vmatpush1.msra.mxu0 0.0
  %1594 = vmatprep.subr.mxu0 0.0
  %1595 = vmatpush1.msra.mxu0 0.0
  %1596 = vmatprep.subr.mxu0 0.0
  %1597 = vmatpush1.msra.mxu0 0.0
  %1598 = vmatprep.subr.mxu0 0.0
  %1599 = vmatpush1.msra.mxu0 0.0
  %1600 = vmatprep.subr.mxu0 0.0
  %1601 = vmatpush1.msra.mxu0 0.0
  %1602 = vmatprep.subr.mxu0 0.0
  %1603 = vmatpush1.msra.mxu0 0.0
  %1604 = vmatprep.subr.mxu0 0.0
  %1605 = vmatpush1.msra.mxu0 0.0
  %1606 = vmatprep.subr.mxu0 0.0
  %1607 = vmatpush1.msra.mxu0 0.0
  %1608 = vmatprep.subr.mxu0 0.0
  %1609 = vmatpush1.msra.mxu0 0.0
  %1610 = vmatprep.mubr.f32.mxu0 0.0
  %1611 = vmatmul.mubr.f32.gmra.mrb[0].mxu0 %v1538
  %v1612 = vpop.f32.mrb[0].mxu0
  %v1613 = vadd.f32 0.0, %v1612
  %v1614 = vpop.f32.mrb[0].mxu0
  %v1615 = vadd.f32 0.0, %v1614
  %1616 = vmatprep.mubr.f32.mxu0 0.0
  %1617 = vmatmul.mubr.f32.gmra.mrb[0].mxu0 %v1541
  %v1618 = vpop.f32.mrb[0].mxu0
  %v1619 = vadd.f32 0.0, %v1618
  %v1620 = vpop.f32.mrb[0].mxu0
  %v1621 = vadd.f32 0.0, %v1620
  %1622 = vmatprep.mubr.f32.mxu0 0.0
  %1623 = vmatmul.mubr.f32.gmra.mrb[0].mxu0 %v1544
  %v1624 = vpop.f32.mrb[0].mxu0
  %v1625 = vadd.f32 0.0, %v1624
  %v1626 = vpop.f32.mrb[0].mxu0
  %v1627 = vadd.f32 0.0, %v1626
  %1628 = vdwg.mxu0
  %v1629 = vadd.f32 %v1466, %v1613
  %v1630 = vadd.f32 %v1467, %v1615
  %v1631 = vadd.f32 %v1468, %v1619
  %v1632 = vadd.f32 %v1469, %v1621
  %v1633 = vadd.f32 %v1470, %v1625
  %v1634 = vadd.f32 %v1471, %v1627
  %v1637 = vrot.slane %v178, 6
  %v1638 = vrot.slane %v180, 6
  %v1641 = vrot.slane %v178, 4
  %v1642 = vrot.slane %v180, 4
  %v1645 = vsel %vm336, %v178, %v1637
  %v1646 = vsel %vm336, %v180, %v1638
  %v1647 = vsel %vm339, %v1645, %v1641
  %v1648 = vsel %vm339, %v1646, %v1642
  %v1649 = vrot.slane %v249, 4
  %v1650 = vrot.slane %v251, 4
  %v1653 = vsel %vm336, %v249, %v326
  %v1654 = vsel %vm336, %v251, %v327
  %v1655 = vsel %vm339, %v1653, %v1649
  %v1656 = vsel %vm339, %v1654, %v1650
  %v1657 = vrot.slane %v320, 6
  %v1658 = vrot.slane %v322, 6
  %v1661 = vsel %vm336, %v320, %v1657
  %v1662 = vsel %vm336, %v322, %v1658
  %v1663 = vsel %vm339, %v1661, %v332
  %v1664 = vsel %vm339, %v1662, %v333
  %v1665 = vmul.f32 %v1629, %v1647
  %v1666 = vmul.f32 %v1630, %v1648
  %v1669 = vrot.slane %v1655, 2
  %v1670 = vrot.slane %v1656, 2
  %v1673 = vmul.f32 %v1629, %v1669
  %v1674 = vmul.f32 %v1630, %v1670
  %v1675 = vmul.f32 %v1631, %v1669
  %v1676 = vmul.f32 %v1632, %v1670
  %v1681 = vrot.slane %v1673, 6
  %v1682 = vrot.slane %v1675, 6
  %v1683 = vsel %vm336, %v1681, %v1682
  %v1684 = vrot.slane %v1674, 6
  %v1685 = vrot.slane %v1676, 6
  %v1686 = vsel %vm336, %v1684, %v1685
  %v1689 = vadd.f32 %v1665, %v1683
  %v1690 = vadd.f32 %v1666, %v1686
  %v1693 = vrot.slane %v1663, 4
  %v1694 = vrot.slane %v1664, 4
  %v1697 = vmul.f32 %v1631, %v1693
  %v1698 = vmul.f32 %v1632, %v1694
  %v1699 = vmul.f32 %v1633, %v1693
  %v1700 = vmul.f32 %v1634, %v1694
  %v1705 = vrot.slane %v1697, 4
  %v1706 = vrot.slane %v1699, 4
  %v1707 = vsel %vm339, %v1705, %v1706
  %v1708 = vrot.slane %v1698, 4
  %v1709 = vrot.slane %v1700, 4
  %v1710 = vsel %vm339, %v1708, %v1709
  %v1713 = vadd.f32 %v1689, %v1707
  %v1714 = vadd.f32 %v1690, %v1710
  %v1717 = vrot.slane %v1633, 2
  %v1718 = vrot.slane %v1634, 2
  %v1721 = vadd.f32 %v1713, %v1717
  %v1722 = vadd.f32 %v1714, %v1718
  %1723 = vst [vmem:[%s6] sm:$0x3f] %v1721
  %1724 = vst [vmem:[%s6 + $0x8] sm:$0x3f] %v1722
  %v1726 = vrot.slane %v546, 2
  %v1729 = vrot.slane %v562, 6
  %v1732 = vrot.slane %v640, 4
  %v1735 = vrot.slane %v646, 2
  %v1738 = vrot.slane %v730, 6
  %v1741 = vrot.slane %v736, 4
  %v1744 = vrot.slane %v742, 2
  %v1747 = vrot.slane %v826, 6
  %v1750 = vrot.slane %v832, 4
  %v1752 = vsel %vm886, %v441, %v1726
  %v1753 = vsel %vm336, %v554, %v1729
  %v1754 = vsel %vm339, %v1753, %v1732
  %v1755 = vsel %vm886, %v1754, %v1735
  %v1756 = vsel %vm336, %v652, %v1738
  %v1757 = vsel %vm339, %v1756, %v1741
  %v1758 = vsel %vm886, %v1757, %v1744
  %v1759 = vsel %vm336, %v820, %v1747
  %v1760 = vsel %vm339, %v1759, %v1750
  %1761 = vst.msk [vmem:[%s7] sm:$0xff] %vm961, %v1752
  %1762 = vst.msk [vmem:[%s7 + $0x8] sm:$0xff] %vm961, %v1755
  %1763 = vst.msk [vmem:[%s7 + $0x10] sm:$0xff] %vm961, %v1758
  %vm1764 = vcmask 62464
  %1765 = vst.msk [vmem:[%s7 + $0x18] sm:$0x3f] %vm1764, %v1760
  // Predicated region
  $region26: #{_lambda_.1} parent=0 // pred_check
    _
  $region27: #{_lambda_.1} parent=0 // pred_check_branch
    %1767 = sbr.rel (0) target = $region29
  $region28: #{_lambda_.1} parent=0 // pred_region
    _
  $region29: #{_lambda_.1} parent=0 // pred_fallthru
    _
  // Predicated region
  $region30: #{_lambda_.1} parent=0 // pred_check
    _
  $region31: #{_lambda_.1} parent=0 // pred_check_branch
    %1769 = sbr.rel (0) target = $region33
  $region32: #{_lambda_.1} parent=0 // pred_region
    _
  $region33: #{_lambda_.1} parent=0 // pred_fallthru
    _
  // Predicated region
  $region34: #{_lambda_.1} parent=0 // pred_check
    _
  $region35: #{_lambda_.1} parent=0 // pred_check_branch
    %1771 = sbr.rel (0) target = $region37
  $region36: #{_lambda_.1} parent=0 // pred_region
    _
  $region37: #{_lambda_.1} parent=0 // pred_fallthru
    _
  // Predicated region
  $region38: #{_lambda_.1} parent=0 // pred_check
    _
  $region39: #{_lambda_.1} parent=0 // pred_check_branch
    %1773 = sbr.rel (0) target = $region41
  $region40: #{_lambda_.1} parent=0 // pred_region
    _
  $region41: #{_lambda_.1} parent=0 // pred_fallthru
    _

</llo_original>
